<compile_context>
chip_gen: v6e
topology: v6e:2x2x1
jax: 0.10.0
libtpu: 0.0.40
codegen_flags: <defaults>
</compile_context>

<pallas_src>
import jax
import jax.numpy as jnp
from jax.experimental import pallas as pl
from jax.experimental.pallas import tpu as pltpu

_BN_EPS = 1e-5
_K = 3          # n_puntos (kernel_size); padding=1 keeps the length


def _elu(x):
    # F.elu(alpha=1).  exp(x)-1 rather than expm1: exp is guaranteed to lower on
    # Mosaic; the numeric difference near 0 is below f32 tolerance here.
    return jnp.where(x > 0, x, jnp.exp(x) - 1.0)


# ----------------------------- fused kernel ----------------------------------


def _fused_kernel(
    x_ref,
    s11, h11, w11,
    s12, h12, w12,
    s21, h21, w21,
    s22, h22, w22,
    s31, h31, w31,
    s32, h32, w32,
    w_fc1, b_fc1, w_fc2, b_fc2,
    o_ref,
    stage_ref,
):
    """Entire SConv1D_2 forward; activations never leave VMEM."""

    def bn_elu_conv(x, scale_ref, shift_ref, w_ref):
        # BatchNorm1d(inference, bias of previous conv folded in) -> ELU ->
        # Conv1d(kernel=_K, padding=1, bias folded into next layer's shift)
        # x: (N, L, Cin) live value; w_ref: (K*Cin, Cout) im2col layout.
        n, l, cin = x.shape
        cout = w_ref.shape[1]
        y = _elu(x * scale_ref[...] + shift_ref[...])
        # zero-padded staging in the shared VMEM scratch: body + two zero rows
        zrow = jnp.zeros((n, 1, cin), jnp.float32)
        stage_ref[:, 0:1, :cin] = zrow
        stage_ref[:, l + 1:l + 2, :cin] = zrow
        stage_ref[:, 1:l + 1, :cin] = y
        # im2col: K shifted views lane-concatenated -> a single MXU matmul
        cols = jnp.concatenate(
            [stage_ref[:, t:t + l, :cin] for t in range(_K)], axis=-1)   # (N, L, K*Cin)
        out = jnp.dot(cols.reshape(n * l, _K * cin), w_ref[...],
                      preferred_element_type=jnp.float32)
        return out.reshape(n, l, cout)

    def maxpool2(x):
        # MaxPool1d(kernel=2, stride=2) via strided pl.ds reads of the shared scratch.
        n, l, c = x.shape
        lh = l // 2
        stage_ref[:, :l, :c] = x
        return jnp.maximum(stage_ref[:, pl.ds(0, lh, 2), :c],
                           stage_ref[:, pl.ds(1, lh, 2), :c])

    x = x_ref[...]                                     # (N, L, Cin), channels-last
    x = bn_elu_conv(x, s11, h11, w11)
    x = bn_elu_conv(x, s12, h12, w12)
    x = maxpool2(x)                                    # do1: identity (eval)
    x = bn_elu_conv(x, s21, h21, w21)
    x = bn_elu_conv(x, s22, h22, w22)
    x = maxpool2(x)                                    # do2: identity (eval)
    x = bn_elu_conv(x, s31, h31, w31)
    x = bn_elu_conv(x, s32, h32, w32)
    x = maxpool2(x)                                    # do3: identity (eval)

    # torch.flatten(x, 1) is channel-major on (N, C, L); fc1 weight rows were
    # pre-permuted on the host to position-major order, so a lane concat over
    # the (two) remaining positions reproduces the same contraction.
    lf = x.shape[1]
    flat = jnp.concatenate([x[:, i, :] for i in range(lf)], axis=-1)   # (N, lf*C)
    hdd = _elu(jnp.dot(flat, w_fc1[...], preferred_element_type=jnp.float32) + b_fc1[...])
    z = jnp.dot(hdd, w_fc2[...], preferred_element_type=jnp.float32) + b_fc2[...]
    o_ref[...] = 1.0 / (1.0 + jnp.exp(-z))             # dofc: identity (eval)


# ----------------------------- wrapper ----------------------------------------

_VMEM = pl.BlockSpec(memory_space=pltpu.MemorySpace.VMEM)
_LAYERS = ("11", "12", "21", "22", "31", "32")


def sconv1d_2_forward(x_ncl, fp):
    """x_ncl: (N, C_in, L) PyTorch-layout input; fp: output of prepare_params()."""
    n, _, l = x_ncl.shape
    x_nlc = jnp.transpose(x_ncl, (0, 2, 1))            # channels-last: C on the lane axis
    cmax = fp["w32"].shape[1]                          # widest channel count (4*n_features)
    args = [x_nlc]
    for name in _LAYERS:
        args += [fp["s" + name], fp["h" + name], fp["w" + name]]
    args += [fp["fc1_w"], fp["fc1_b"], fp["fc2_w"], fp["fc2_b"]]
    return pl.pallas_call(
        _fused_kernel,
        out_shape=jax.ShapeDtypeStruct((n, 1), jnp.float32),
        in_specs=[_VMEM] * len(args),
        out_specs=_VMEM,
        scratch_shapes=[
            pltpu.VMEM((n, l + 2, cmax), jnp.float32),   # shared conv-pad / maxpool staging
        ],
    )(*args)


def prepare_params(p):
    """Host-side, once: fold BN stats into scale/shift, fold every conv bias into
    the next layer's shift (or into fc1's bias for the last conv), reshape conv
    weights to im2col layout (K*Cin, Cout), and permute fc1 rows from
    torch-flatten (C-major) order to the kernel's position-major flatten order."""
    scales, shifts = {}, {}
    for name in _LAYERS:
        bn = p["bn" + name]
        scale = bn["gamma"] / jnp.sqrt(bn["var"] + _BN_EPS)
        shift = bn["beta"] - bn["mean"] * scale
        scales[name], shifts[name] = scale, shift
    # conv bias of layer `src` is a per-channel constant; MaxPool/Dropout(eval)
    # commute with it, so it folds into the following BN's shift.
    for src, dst in (("11", "12"), ("12", "21"), ("21", "22"),
                     ("22", "31"), ("31", "32")):
        shifts[dst] = shifts[dst] + scales[dst] * p["b" + src]

    fp = {}
    for name in _LAYERS:
        cin = scales[name].shape[0]
        fp["s" + name] = scales[name].reshape(1, 1, cin)
        fp["h" + name] = shifts[name].reshape(1, 1, cin)
        w = p["w" + name]                               # (K, Cin, Cout), tap-major
        k, _, cout = w.shape
        fp["w" + name] = w.reshape(k * cin, cout)       # row index = t*Cin + c

    c_fin = p["w32"].shape[2]                           # final channel count
    w1 = p["fc1_w"]                                     # (c_fin*l_fin, 1024), C-major rows
    l_fin = w1.shape[0] // c_fin
    fc1_w = (w1.reshape(c_fin, l_fin, -1)
               .transpose(1, 0, 2)
               .reshape(l_fin * c_fin, -1))             # rows reordered to l-major
    fp["fc1_w"] = fc1_w
    # conv32 bias survives MaxPool unchanged; push it through flatten into fc1 bias.
    b32_flat = jnp.tile(p["b32"], l_fin)                # kernel flatten order: l-major
    fp["fc1_b"] = (p["fc1_b"] + b32_flat @ fc1_w).reshape(1, -1)
    fp["fc2_w"] = p["fc2_w"]
    fp["fc2_b"] = p["fc2_b"].reshape(1, -1)
    return fp


# ----------------------------- params & reference ------------------------------


def init_params(key, in_features, n_features, n_puntos, fcval):
    keys = iter(jax.random.split(key, 64))

    def bn(c):
        return dict(
            gamma=1.0 + 0.1 * jax.random.normal(next(keys), (c,), jnp.float32),
            beta=0.1 * jax.random.normal(next(keys), (c,), jnp.float32),
            mean=0.1 * jax.random.normal(next(keys), (c,), jnp.float32),
            var=1.0 + 0.1 * jnp.abs(jax.random.normal(next(keys), (c,), jnp.float32)),
        )

    def conv_w(cin, cout):
        # PyTorch Conv1d weight (Cout, Cin, K) -> tap-major (K, Cin, Cout)
        w = 0.1 * jax.random.normal(next(keys), (cout, cin, n_puntos), jnp.float32)
        return jnp.transpose(w, (2, 1, 0))

    def bias(cout):
        return 0.1 * jax.random.normal(next(keys), (cout,), jnp.float32)

    nf = n_features
    p = {}
    p["bn11"], p["w11"], p["b11"] = bn(in_features), conv_w(in_features, nf), bias(nf)
    p["bn12"], p["w12"], p["b12"] = bn(nf), conv_w(nf, nf), bias(nf)
    p["bn21"], p["w21"], p["b21"] = bn(nf), conv_w(nf, 2 * nf), bias(2 * nf)
    p["bn22"], p["w22"], p["b22"] = bn(2 * nf), conv_w(2 * nf, 2 * nf), bias(2 * nf)
    p["bn31"], p["w31"], p["b31"] = bn(2 * nf), conv_w(2 * nf, 4 * nf), bias(4 * nf)
    p["bn32"], p["w32"], p["b32"] = bn(4 * nf), conv_w(4 * nf, 4 * nf), bias(4 * nf)
    # PyTorch Linear weight (out, in) -> (in, out)
    p["fc1_w"] = jnp.transpose(0.05 * jax.random.normal(next(keys), (1024, fcval), jnp.float32))
    p["fc1_b"] = 0.05 * jax.random.normal(next(keys), (1024,), jnp.float32)
    p["fc2_w"] = jnp.transpose(0.05 * jax.random.normal(next(keys), (1, 1024), jnp.float32))
    p["fc2_b"] = 0.05 * jax.random.normal(next(keys), (1,), jnp.float32)
    return p


def _reference_forward(x_ncl, p):
    """Pure-JAX (XLA) reference of the PyTorch forward, NCL layout, unfused params."""
    def bn(x, b):
        inv = 1.0 / jnp.sqrt(b["var"] + _BN_EPS)
        return ((x - b["mean"][None, :, None]) * (b["gamma"] * inv)[None, :, None]
                + b["beta"][None, :, None])

    def elu(v):
        return jnp.where(v > 0, v, jnp.exp(v) - 1.0)

    def conv(x, w_kio, bias):
        w_oik = jnp.transpose(w_kio, (2, 1, 0))          # (Cout, Cin, K)
        y = jax.lax.conv_general_dilated(
            x, w_oik, window_strides=(1,), padding=((1, 1),),
            dimension_numbers=("NCH", "OIH", "NCH"))
        return y + bias[None, :, None]

    def mp(x):
        n, c, l = x.shape
        return jnp.max(x.reshape(n, c, l // 2, 2), axis=-1)

    x = conv(elu(bn(x_ncl, p["bn11"])), p["w11"], p["b11"])
    x = conv(elu(bn(x, p["bn12"])), p["w12"], p["b12"])
    x = mp(x)
    x = conv(elu(bn(x, p["bn21"])), p["w21"], p["b21"])
    x = conv(elu(bn(x, p["bn22"])), p["w22"], p["b22"])
    x = mp(x)
    x = conv(elu(bn(x, p["bn31"])), p["w31"], p["b31"])
    x = conv(elu(bn(x, p["bn32"])), p["w32"], p["b32"])
    x = mp(x)
    flat = x.reshape(x.shape[0], -1)                      # torch.flatten(x, 1)
    h = elu(flat @ p["fc1_w"] + p["fc1_b"])
    z = h @ p["fc2_w"] + p["fc2_b"]
    return 1.0 / (1.0 + jnp.exp(-z))


# ----------------------------- main -------------------------------------------

if __name__ == "__main__":
    batch = 2
    in_features = 4
    n_features = 8
    n_puntos = 3                              # kernel_size=3 with padding=1 keeps length
    length = 16                               # 16 -> 8 -> 4 -> 2 after three maxpools
    fcval = 4 * n_features * (length // 8)    # = 64, flatten size feeding fc1

    key = jax.random.PRNGKey(0)
    kx, kp = jax.random.split(key)
    x = jax.random.normal(kx, (batch, in_features, length), jnp.float32)  # PyTorch NCL
    params = init_params(kp, in_features, n_features, n_puntos, fcval)
    fused_params = prepare_params(params)     # host-side folding, done once

    out = jax.jit(sconv1d_2_forward)(x, fused_params)   # (batch, 1) sigmoid probs
    jax.block_until_ready(out)
    assert out.shape == (batch, 1)

    ref = _reference_forward(x, params)
    max_diff = float(jnp.max(jnp.abs(out - ref)))
    assert jnp.allclose(out, ref, atol=5e-3, rtol=0.0), f"max abs diff {max_diff}"

    print("KERNEL_OK")
</pallas_src>

<mosaic_0001>
module attributes {stable_mosaic.version = 11 : i64} {
  func.func @_fused_kernel(%arg0: memref<2x16x4xf32, #tpu.memory_space<vmem>>, %arg1: memref<1x1x4xf32, #tpu.memory_space<vmem>>, %arg2: memref<1x1x4xf32, #tpu.memory_space<vmem>>, %arg3: memref<12x8xf32, #tpu.memory_space<vmem>>, %arg4: memref<1x1x8xf32, #tpu.memory_space<vmem>>, %arg5: memref<1x1x8xf32, #tpu.memory_space<vmem>>, %arg6: memref<24x8xf32, #tpu.memory_space<vmem>>, %arg7: memref<1x1x8xf32, #tpu.memory_space<vmem>>, %arg8: memref<1x1x8xf32, #tpu.memory_space<vmem>>, %arg9: memref<24x16xf32, #tpu.memory_space<vmem>>, %arg10: memref<1x1x16xf32, #tpu.memory_space<vmem>>, %arg11: memref<1x1x16xf32, #tpu.memory_space<vmem>>, %arg12: memref<48x16xf32, #tpu.memory_space<vmem>>, %arg13: memref<1x1x16xf32, #tpu.memory_space<vmem>>, %arg14: memref<1x1x16xf32, #tpu.memory_space<vmem>>, %arg15: memref<48x32xf32, #tpu.memory_space<vmem>>, %arg16: memref<1x1x32xf32, #tpu.memory_space<vmem>>, %arg17: memref<1x1x32xf32, #tpu.memory_space<vmem>>, %arg18: memref<96x32xf32, #tpu.memory_space<vmem>>, %arg19: memref<64x1024xf32, #tpu.memory_space<vmem>>, %arg20: memref<1x1024xf32, #tpu.memory_space<vmem>>, %arg21: memref<1024x1xf32, #tpu.memory_space<vmem>>, %arg22: memref<1x1xf32, #tpu.memory_space<vmem>>, %arg23: memref<2x1xf32, #tpu.memory_space<vmem>>, %arg24: memref<2x18x32xf32, #tpu.memory_space<vmem>>) attributes {dimension_semantics = [], scalar_prefetch = 0 : i64, scratch_operands = 1 : i64, tpu.core_type = #tpu.core_type<tc>} {
    %c0 = arith.constant 0 : index
    %c0_0 = arith.constant 0 : index
    %c0_1 = arith.constant 0 : index
    %0 = vector.load %arg0[%c0, %c0_0, %c0_1] : memref<2x16x4xf32, #tpu.memory_space<vmem>>, vector<2x16x4xf32>
    %c0_2 = arith.constant 0 : index
    %c0_3 = arith.constant 0 : index
    %c0_4 = arith.constant 0 : index
    %1 = vector.load %arg1[%c0_2, %c0_3, %c0_4] : memref<1x1x4xf32, #tpu.memory_space<vmem>>, vector<1x1x4xf32>
    %2 = vector.broadcast %1 : vector<1x1x4xf32> to vector<2x16x4xf32>
    %3 = arith.mulf %0, %2 : vector<2x16x4xf32>
    %c0_5 = arith.constant 0 : index
    %c0_6 = arith.constant 0 : index
    %c0_7 = arith.constant 0 : index
    %4 = vector.load %arg2[%c0_5, %c0_6, %c0_7] : memref<1x1x4xf32, #tpu.memory_space<vmem>>, vector<1x1x4xf32>
    %5 = vector.broadcast %4 : vector<1x1x4xf32> to vector<2x16x4xf32>
    %6 = arith.addf %3, %5 : vector<2x16x4xf32>
    %cst = arith.constant 0.000000e+00 : f32
    %7 = vector.broadcast %cst : f32 to vector<2x16x4xf32>
    %8 = arith.cmpf ogt, %6, %7 : vector<2x16x4xf32>
    %9 = math.exp %6 : vector<2x16x4xf32>
    %cst_8 = arith.constant 1.000000e+00 : f32
    %10 = vector.broadcast %cst_8 : f32 to vector<2x16x4xf32>
    %11 = arith.subf %9, %10 : vector<2x16x4xf32>
    %12 = arith.select %8, %6, %11 : vector<2x16x4xi1>, vector<2x16x4xf32>
    %cst_9 = arith.constant 0.000000e+00 : f32
    %13 = vector.broadcast %cst_9 : f32 to vector<2x1x4xf32>
    %c0_10 = arith.constant 0 : index
    %c0_11 = arith.constant 0 : index
    %c0_12 = arith.constant 0 : index
    %14 = vector.load %arg24[%c0_10, %c0_11, %c0_12] : memref<2x18x32xf32, #tpu.memory_space<vmem>>, vector<2x1x4xf32>
    tpu.vector_store %arg24[%c0_10, %c0_11, %c0_12], %13 {strides = array<i32>} : memref<2x18x32xf32, #tpu.memory_space<vmem>>, vector<2x1x4xf32>,
    %c0_13 = arith.constant 0 : index
    %c17 = arith.constant 17 : index
    %c0_14 = arith.constant 0 : index
    %15 = vector.load %arg24[%c0_13, %c17, %c0_14] : memref<2x18x32xf32, #tpu.memory_space<vmem>>, vector<2x1x4xf32>
    tpu.vector_store %arg24[%c0_13, %c17, %c0_14], %13 {strides = array<i32>} : memref<2x18x32xf32, #tpu.memory_space<vmem>>, vector<2x1x4xf32>,
    %c0_15 = arith.constant 0 : index
    %c1 = arith.constant 1 : index
    %c0_16 = arith.constant 0 : index
    %16 = vector.load %arg24[%c0_15, %c1, %c0_16] : memref<2x18x32xf32, #tpu.memory_space<vmem>>, vector<2x16x4xf32>
    tpu.vector_store %arg24[%c0_15, %c1, %c0_16], %12 {strides = array<i32>} : memref<2x18x32xf32, #tpu.memory_space<vmem>>, vector<2x16x4xf32>,
    %c0_17 = arith.constant 0 : index
    %c0_18 = arith.constant 0 : index
    %c0_19 = arith.constant 0 : index
    %17 = vector.load %arg24[%c0_17, %c0_18, %c0_19] : memref<2x18x32xf32, #tpu.memory_space<vmem>>, vector<2x16x4xf32>
    %c0_20 = arith.constant 0 : index
    %c1_21 = arith.constant 1 : index
    %c0_22 = arith.constant 0 : index
    %18 = vector.load %arg24[%c0_20, %c1_21, %c0_22] : memref<2x18x32xf32, #tpu.memory_space<vmem>>, vector<2x16x4xf32>
    %c0_23 = arith.constant 0 : index
    %c2 = arith.constant 2 : index
    %c0_24 = arith.constant 0 : index
    %19 = vector.load %arg24[%c0_23, %c2, %c0_24] : memref<2x18x32xf32, #tpu.memory_space<vmem>>, vector<2x16x4xf32>
    %20 = tpu.concatenate %17, %18, %19 in 2 : vector<2x16x4xf32>, vector<2x16x4xf32>, vector<2x16x4xf32> -> vector<2x16x12xf32>
    %21 = vector.shape_cast %20 : vector<2x16x12xf32> to vector<32x12xf32>
    %c0_25 = arith.constant 0 : index
    %c0_26 = arith.constant 0 : index
    %22 = vector.load %arg3[%c0_25, %c0_26] : memref<12x8xf32, #tpu.memory_space<vmem>>, vector<12x8xf32>
    %cst_27 = arith.constant dense<0.000000e+00> : vector<32x8xf32>
    %23 = tpu.matmul %21, %22, %cst_27 {dimension_numbers = #tpu.dot_dimension_numbers<[1], [0], [0], [1], [0, 0, 1, 1], [], []>} : vector<32x12xf32>, vector<12x8xf32>, vector<32x8xf32> -> vector<32x8xf32>
    %24 = vector.shape_cast %23 : vector<32x8xf32> to vector<2x16x8xf32>
    %c0_28 = arith.constant 0 : index
    %c0_29 = arith.constant 0 : index
    %c0_30 = arith.constant 0 : index
    %25 = vector.load %arg4[%c0_28, %c0_29, %c0_30] : memref<1x1x8xf32, #tpu.memory_space<vmem>>, vector<1x1x8xf32>
    %26 = vector.broadcast %25 : vector<1x1x8xf32> to vector<2x16x8xf32>
    %27 = arith.mulf %24, %26 : vector<2x16x8xf32>
    %c0_31 = arith.constant 0 : index
    %c0_32 = arith.constant 0 : index
    %c0_33 = arith.constant 0 : index
    %28 = vector.load %arg5[%c0_31, %c0_32, %c0_33] : memref<1x1x8xf32, #tpu.memory_space<vmem>>, vector<1x1x8xf32>
    %29 = vector.broadcast %28 : vector<1x1x8xf32> to vector<2x16x8xf32>
    %30 = arith.addf %27, %29 : vector<2x16x8xf32>
    %cst_34 = arith.constant 0.000000e+00 : f32
    %31 = vector.broadcast %cst_34 : f32 to vector<2x16x8xf32>
    %32 = arith.cmpf ogt, %30, %31 : vector<2x16x8xf32>
    %33 = math.exp %30 : vector<2x16x8xf32>
    %cst_35 = arith.constant 1.000000e+00 : f32
    %34 = vector.broadcast %cst_35 : f32 to vector<2x16x8xf32>
    %35 = arith.subf %33, %34 : vector<2x16x8xf32>
    %36 = arith.select %32, %30, %35 : vector<2x16x8xi1>, vector<2x16x8xf32>
    %cst_36 = arith.constant 0.000000e+00 : f32
    %37 = vector.broadcast %cst_36 : f32 to vector<2x1x8xf32>
    %c0_37 = arith.constant 0 : index
    %c0_38 = arith.constant 0 : index
    %c0_39 = arith.constant 0 : index
    %38 = vector.load %arg24[%c0_37, %c0_38, %c0_39] : memref<2x18x32xf32, #tpu.memory_space<vmem>>, vector<2x1x8xf32>
    tpu.vector_store %arg24[%c0_37, %c0_38, %c0_39], %37 {strides = array<i32>} : memref<2x18x32xf32, #tpu.memory_space<vmem>>, vector<2x1x8xf32>,
    %c0_40 = arith.constant 0 : index
    %c17_41 = arith.constant 17 : index
    %c0_42 = arith.constant 0 : index
    %39 = vector.load %arg24[%c0_40, %c17_41, %c0_42] : memref<2x18x32xf32, #tpu.memory_space<vmem>>, vector<2x1x8xf32>
    tpu.vector_store %arg24[%c0_40, %c17_41, %c0_42], %37 {strides = array<i32>} : memref<2x18x32xf32, #tpu.memory_space<vmem>>, vector<2x1x8xf32>,
    %c0_43 = arith.constant 0 : index
    %c1_44 = arith.constant 1 : index
    %c0_45 = arith.constant 0 : index
    %40 = vector.load %arg24[%c0_43, %c1_44, %c0_45] : memref<2x18x32xf32, #tpu.memory_space<vmem>>, vector<2x16x8xf32>
    tpu.vector_store %arg24[%c0_43, %c1_44, %c0_45], %36 {strides = array<i32>} : memref<2x18x32xf32, #tpu.memory_space<vmem>>, vector<2x16x8xf32>,
    %c0_46 = arith.constant 0 : index
    %c0_47 = arith.constant 0 : index
    %c0_48 = arith.constant 0 : index
    %41 = vector.load %arg24[%c0_46, %c0_47, %c0_48] : memref<2x18x32xf32, #tpu.memory_space<vmem>>, vector<2x16x8xf32>
    %c0_49 = arith.constant 0 : index
    %c1_50 = arith.constant 1 : index
    %c0_51 = arith.constant 0 : index
    %42 = vector.load %arg24[%c0_49, %c1_50, %c0_51] : memref<2x18x32xf32, #tpu.memory_space<vmem>>, vector<2x16x8xf32>
    %c0_52 = arith.constant 0 : index
    %c2_53 = arith.constant 2 : index
    %c0_54 = arith.constant 0 : index
    %43 = vector.load %arg24[%c0_52, %c2_53, %c0_54] : memref<2x18x32xf32, #tpu.memory_space<vmem>>, vector<2x16x8xf32>
    %44 = tpu.concatenate %41, %42, %43 in 2 : vector<2x16x8xf32>, vector<2x16x8xf32>, vector<2x16x8xf32> -> vector<2x16x24xf32>
    %45 = vector.shape_cast %44 : vector<2x16x24xf32> to vector<32x24xf32>
    %c0_55 = arith.constant 0 : index
    %c0_56 = arith.constant 0 : index
    %46 = vector.load %arg6[%c0_55, %c0_56] : memref<24x8xf32, #tpu.memory_space<vmem>>, vector<24x8xf32>
    %cst_57 = arith.constant dense<0.000000e+00> : vector<32x8xf32>
    %47 = tpu.matmul %45, %46, %cst_57 {dimension_numbers = #tpu.dot_dimension_numbers<[1], [0], [0], [1], [0, 0, 1, 1], [], []>} : vector<32x24xf32>, vector<24x8xf32>, vector<32x8xf32> -> vector<32x8xf32>
    %48 = vector.shape_cast %47 : vector<32x8xf32> to vector<2x16x8xf32>
    %c0_58 = arith.constant 0 : index
    %c0_59 = arith.constant 0 : index
    %c0_60 = arith.constant 0 : index
    %49 = vector.load %arg24[%c0_58, %c0_59, %c0_60] : memref<2x18x32xf32, #tpu.memory_space<vmem>>, vector<2x16x8xf32>
    tpu.vector_store %arg24[%c0_58, %c0_59, %c0_60], %48 {strides = array<i32>} : memref<2x18x32xf32, #tpu.memory_space<vmem>>, vector<2x16x8xf32>,
    %c0_61 = arith.constant 0 : index
    %c0_62 = arith.constant 0 : index
    %c0_63 = arith.constant 0 : index
    %50 = tpu.strided_load %arg24[%c0_61, %c0_62, %c0_63] {strides = array<i32: 1, 2, 1>} : memref<2x18x32xf32, #tpu.memory_space<vmem>>, vector<2x8x8xf32>
    %c0_64 = arith.constant 0 : index
    %c1_65 = arith.constant 1 : index
    %c0_66 = arith.constant 0 : index
    %51 = tpu.strided_load %arg24[%c0_64, %c1_65, %c0_66] {strides = array<i32: 1, 2, 1>} : memref<2x18x32xf32, #tpu.memory_space<vmem>>, vector<2x8x8xf32>
    %52 = arith.maximumf %50, %51 : vector<2x8x8xf32>
    %c0_67 = arith.constant 0 : index
    %c0_68 = arith.constant 0 : index
    %c0_69 = arith.constant 0 : index
    %53 = vector.load %arg7[%c0_67, %c0_68, %c0_69] : memref<1x1x8xf32, #tpu.memory_space<vmem>>, vector<1x1x8xf32>
    %54 = vector.broadcast %53 : vector<1x1x8xf32> to vector<2x8x8xf32>
    %55 = arith.mulf %52, %54 : vector<2x8x8xf32>
    %c0_70 = arith.constant 0 : index
    %c0_71 = arith.constant 0 : index
    %c0_72 = arith.constant 0 : index
    %56 = vector.load %arg8[%c0_70, %c0_71, %c0_72] : memref<1x1x8xf32, #tpu.memory_space<vmem>>, vector<1x1x8xf32>
    %57 = vector.broadcast %56 : vector<1x1x8xf32> to vector<2x8x8xf32>
    %58 = arith.addf %55, %57 : vector<2x8x8xf32>
    %cst_73 = arith.constant 0.000000e+00 : f32
    %59 = vector.broadcast %cst_73 : f32 to vector<2x8x8xf32>
    %60 = arith.cmpf ogt, %58, %59 : vector<2x8x8xf32>
    %61 = math.exp %58 : vector<2x8x8xf32>
    %cst_74 = arith.constant 1.000000e+00 : f32
    %62 = vector.broadcast %cst_74 : f32 to vector<2x8x8xf32>
    %63 = arith.subf %61, %62 : vector<2x8x8xf32>
    %64 = arith.select %60, %58, %63 : vector<2x8x8xi1>, vector<2x8x8xf32>
    %cst_75 = arith.constant 0.000000e+00 : f32
    %65 = vector.broadcast %cst_75 : f32 to vector<2x1x8xf32>
    %c0_76 = arith.constant 0 : index
    %c0_77 = arith.constant 0 : index
    %c0_78 = arith.constant 0 : index
    %66 = vector.load %arg24[%c0_76, %c0_77, %c0_78] : memref<2x18x32xf32, #tpu.memory_space<vmem>>, vector<2x1x8xf32>
    tpu.vector_store %arg24[%c0_76, %c0_77, %c0_78], %65 {strides = array<i32>} : memref<2x18x32xf32, #tpu.memory_space<vmem>>, vector<2x1x8xf32>,
    %c0_79 = arith.constant 0 : index
    %c9 = arith.constant 9 : index
    %c0_80 = arith.constant 0 : index
    %67 = vector.load %arg24[%c0_79, %c9, %c0_80] : memref<2x18x32xf32, #tpu.memory_space<vmem>>, vector<2x1x8xf32>
    tpu.vector_store %arg24[%c0_79, %c9, %c0_80], %65 {strides = array<i32>} : memref<2x18x32xf32, #tpu.memory_space<vmem>>, vector<2x1x8xf32>,
    %c0_81 = arith.constant 0 : index
    %c1_82 = arith.constant 1 : index
    %c0_83 = arith.constant 0 : index
    %68 = vector.load %arg24[%c0_81, %c1_82, %c0_83] : memref<2x18x32xf32, #tpu.memory_space<vmem>>, vector<2x8x8xf32>
    tpu.vector_store %arg24[%c0_81, %c1_82, %c0_83], %64 {strides = array<i32>} : memref<2x18x32xf32, #tpu.memory_space<vmem>>, vector<2x8x8xf32>,
    %c0_84 = arith.constant 0 : index
    %c0_85 = arith.constant 0 : index
    %c0_86 = arith.constant 0 : index
    %69 = vector.load %arg24[%c0_84, %c0_85, %c0_86] : memref<2x18x32xf32, #tpu.memory_space<vmem>>, vector<2x8x8xf32>
    %c0_87 = arith.constant 0 : index
    %c1_88 = arith.constant 1 : index
    %c0_89 = arith.constant 0 : index
    %70 = vector.load %arg24[%c0_87, %c1_88, %c0_89] : memref<2x18x32xf32, #tpu.memory_space<vmem>>, vector<2x8x8xf32>
    %c0_90 = arith.constant 0 : index
    %c2_91 = arith.constant 2 : index
    %c0_92 = arith.constant 0 : index
    %71 = vector.load %arg24[%c0_90, %c2_91, %c0_92] : memref<2x18x32xf32, #tpu.memory_space<vmem>>, vector<2x8x8xf32>
    %72 = tpu.concatenate %69, %70, %71 in 2 : vector<2x8x8xf32>, vector<2x8x8xf32>, vector<2x8x8xf32> -> vector<2x8x24xf32>
    %73 = vector.shape_cast %72 : vector<2x8x24xf32> to vector<16x24xf32>
    %c0_93 = arith.constant 0 : index
    %c0_94 = arith.constant 0 : index
    %74 = vector.load %arg9[%c0_93, %c0_94] : memref<24x16xf32, #tpu.memory_space<vmem>>, vector<24x16xf32>
    %cst_95 = arith.constant dense<0.000000e+00> : vector<16x16xf32>
    %75 = tpu.matmul %73, %74, %cst_95 {dimension_numbers = #tpu.dot_dimension_numbers<[1], [0], [0], [1], [0, 0, 1, 1], [], []>} : vector<16x24xf32>, vector<24x16xf32>, vector<16x16xf32> -> vector<16x16xf32>
    %76 = vector.shape_cast %75 : vector<16x16xf32> to vector<2x8x16xf32>
    %c0_96 = arith.constant 0 : index
    %c0_97 = arith.constant 0 : index
    %c0_98 = arith.constant 0 : index
    %77 = vector.load %arg10[%c0_96, %c0_97, %c0_98] : memref<1x1x16xf32, #tpu.memory_space<vmem>>, vector<1x1x16xf32>
    %78 = vector.broadcast %77 : vector<1x1x16xf32> to vector<2x8x16xf32>
    %79 = arith.mulf %76, %78 : vector<2x8x16xf32>
    %c0_99 = arith.constant 0 : index
    %c0_100 = arith.constant 0 : index
    %c0_101 = arith.constant 0 : index
    %80 = vector.load %arg11[%c0_99, %c0_100, %c0_101] : memref<1x1x16xf32, #tpu.memory_space<vmem>>, vector<1x1x16xf32>
    %81 = vector.broadcast %80 : vector<1x1x16xf32> to vector<2x8x16xf32>
    %82 = arith.addf %79, %81 : vector<2x8x16xf32>
    %cst_102 = arith.constant 0.000000e+00 : f32
    %83 = vector.broadcast %cst_102 : f32 to vector<2x8x16xf32>
    %84 = arith.cmpf ogt, %82, %83 : vector<2x8x16xf32>
    %85 = math.exp %82 : vector<2x8x16xf32>
    %cst_103 = arith.constant 1.000000e+00 : f32
    %86 = vector.broadcast %cst_103 : f32 to vector<2x8x16xf32>
    %87 = arith.subf %85, %86 : vector<2x8x16xf32>
    %88 = arith.select %84, %82, %87 : vector<2x8x16xi1>, vector<2x8x16xf32>
    %cst_104 = arith.constant 0.000000e+00 : f32
    %89 = vector.broadcast %cst_104 : f32 to vector<2x1x16xf32>
    %c0_105 = arith.constant 0 : index
    %c0_106 = arith.constant 0 : index
    %c0_107 = arith.constant 0 : index
    %90 = vector.load %arg24[%c0_105, %c0_106, %c0_107] : memref<2x18x32xf32, #tpu.memory_space<vmem>>, vector<2x1x16xf32>
    tpu.vector_store %arg24[%c0_105, %c0_106, %c0_107], %89 {strides = array<i32>} : memref<2x18x32xf32, #tpu.memory_space<vmem>>, vector<2x1x16xf32>,
    %c0_108 = arith.constant 0 : index
    %c9_109 = arith.constant 9 : index
    %c0_110 = arith.constant 0 : index
    %91 = vector.load %arg24[%c0_108, %c9_109, %c0_110] : memref<2x18x32xf32, #tpu.memory_space<vmem>>, vector<2x1x16xf32>
    tpu.vector_store %arg24[%c0_108, %c9_109, %c0_110], %89 {strides = array<i32>} : memref<2x18x32xf32, #tpu.memory_space<vmem>>, vector<2x1x16xf32>,
    %c0_111 = arith.constant 0 : index
    %c1_112 = arith.constant 1 : index
    %c0_113 = arith.constant 0 : index
    %92 = vector.load %arg24[%c0_111, %c1_112, %c0_113] : memref<2x18x32xf32, #tpu.memory_space<vmem>>, vector<2x8x16xf32>
    tpu.vector_store %arg24[%c0_111, %c1_112, %c0_113], %88 {strides = array<i32>} : memref<2x18x32xf32, #tpu.memory_space<vmem>>, vector<2x8x16xf32>,
    %c0_114 = arith.constant 0 : index
    %c0_115 = arith.constant 0 : index
    %c0_116 = arith.constant 0 : index
    %93 = vector.load %arg24[%c0_114, %c0_115, %c0_116] : memref<2x18x32xf32, #tpu.memory_space<vmem>>, vector<2x8x16xf32>
    %c0_117 = arith.constant 0 : index
    %c1_118 = arith.constant 1 : index
    %c0_119 = arith.constant 0 : index
    %94 = vector.load %arg24[%c0_117, %c1_118, %c0_119] : memref<2x18x32xf32, #tpu.memory_space<vmem>>, vector<2x8x16xf32>
    %c0_120 = arith.constant 0 : index
    %c2_121 = arith.constant 2 : index
    %c0_122 = arith.constant 0 : index
    %95 = vector.load %arg24[%c0_120, %c2_121, %c0_122] : memref<2x18x32xf32, #tpu.memory_space<vmem>>, vector<2x8x16xf32>
    %96 = tpu.concatenate %93, %94, %95 in 2 : vector<2x8x16xf32>, vector<2x8x16xf32>, vector<2x8x16xf32> -> vector<2x8x48xf32>
    %97 = vector.shape_cast %96 : vector<2x8x48xf32> to vector<16x48xf32>
    %c0_123 = arith.constant 0 : index
    %c0_124 = arith.constant 0 : index
    %98 = vector.load %arg12[%c0_123, %c0_124] : memref<48x16xf32, #tpu.memory_space<vmem>>, vector<48x16xf32>
    %cst_125 = arith.constant dense<0.000000e+00> : vector<16x16xf32>
    %99 = tpu.matmul %97, %98, %cst_125 {dimension_numbers = #tpu.dot_dimension_numbers<[1], [0], [0], [1], [0, 0, 1, 1], [], []>} : vector<16x48xf32>, vector<48x16xf32>, vector<16x16xf32> -> vector<16x16xf32>
    %100 = vector.shape_cast %99 : vector<16x16xf32> to vector<2x8x16xf32>
    %c0_126 = arith.constant 0 : index
    %c0_127 = arith.constant 0 : index
    %c0_128 = arith.constant 0 : index
    %101 = vector.load %arg24[%c0_126, %c0_127, %c0_128] : memref<2x18x32xf32, #tpu.memory_space<vmem>>, vector<2x8x16xf32>
    tpu.vector_store %arg24[%c0_126, %c0_127, %c0_128], %100 {strides = array<i32>} : memref<2x18x32xf32, #tpu.memory_space<vmem>>, vector<2x8x16xf32>,
    %c0_129 = arith.constant 0 : index
    %c0_130 = arith.constant 0 : index
    %c0_131 = arith.constant 0 : index
    %102 = tpu.strided_load %arg24[%c0_129, %c0_130, %c0_131] {strides = array<i32: 1, 2, 1>} : memref<2x18x32xf32, #tpu.memory_space<vmem>>, vector<2x4x16xf32>
    %c0_132 = arith.constant 0 : index
    %c1_133 = arith.constant 1 : index
    %c0_134 = arith.constant 0 : index
    %103 = tpu.strided_load %arg24[%c0_132, %c1_133, %c0_134] {strides = array<i32: 1, 2, 1>} : memref<2x18x32xf32, #tpu.memory_space<vmem>>, vector<2x4x16xf32>
    %104 = arith.maximumf %102, %103 : vector<2x4x16xf32>
    %c0_135 = arith.constant 0 : index
    %c0_136 = arith.constant 0 : index
    %c0_137 = arith.constant 0 : index
    %105 = vector.load %arg13[%c0_135, %c0_136, %c0_137] : memref<1x1x16xf32, #tpu.memory_space<vmem>>, vector<1x1x16xf32>
    %106 = vector.broadcast %105 : vector<1x1x16xf32> to vector<2x4x16xf32>
    %107 = arith.mulf %104, %106 : vector<2x4x16xf32>
    %c0_138 = arith.constant 0 : index
    %c0_139 = arith.constant 0 : index
    %c0_140 = arith.constant 0 : index
    %108 = vector.load %arg14[%c0_138, %c0_139, %c0_140] : memref<1x1x16xf32, #tpu.memory_space<vmem>>, vector<1x1x16xf32>
    %109 = vector.broadcast %108 : vector<1x1x16xf32> to vector<2x4x16xf32>
    %110 = arith.addf %107, %109 : vector<2x4x16xf32>
    %cst_141 = arith.constant 0.000000e+00 : f32
    %111 = vector.broadcast %cst_141 : f32 to vector<2x4x16xf32>
    %112 = arith.cmpf ogt, %110, %111 : vector<2x4x16xf32>
    %113 = math.exp %110 : vector<2x4x16xf32>
    %cst_142 = arith.constant 1.000000e+00 : f32
    %114 = vector.broadcast %cst_142 : f32 to vector<2x4x16xf32>
    %115 = arith.subf %113, %114 : vector<2x4x16xf32>
    %116 = arith.select %112, %110, %115 : vector<2x4x16xi1>, vector<2x4x16xf32>
    %cst_143 = arith.constant 0.000000e+00 : f32
    %117 = vector.broadcast %cst_143 : f32 to vector<2x1x16xf32>
    %c0_144 = arith.constant 0 : index
    %c0_145 = arith.constant 0 : index
    %c0_146 = arith.constant 0 : index
    %118 = vector.load %arg24[%c0_144, %c0_145, %c0_146] : memref<2x18x32xf32, #tpu.memory_space<vmem>>, vector<2x1x16xf32>
    tpu.vector_store %arg24[%c0_144, %c0_145, %c0_146], %117 {strides = array<i32>} : memref<2x18x32xf32, #tpu.memory_space<vmem>>, vector<2x1x16xf32>,
    %c0_147 = arith.constant 0 : index
    %c5 = arith.constant 5 : index
    %c0_148 = arith.constant 0 : index
    %119 = vector.load %arg24[%c0_147, %c5, %c0_148] : memref<2x18x32xf32, #tpu.memory_space<vmem>>, vector<2x1x16xf32>
    tpu.vector_store %arg24[%c0_147, %c5, %c0_148], %117 {strides = array<i32>} : memref<2x18x32xf32, #tpu.memory_space<vmem>>, vector<2x1x16xf32>,
    %c0_149 = arith.constant 0 : index
    %c1_150 = arith.constant 1 : index
    %c0_151 = arith.constant 0 : index
    %120 = vector.load %arg24[%c0_149, %c1_150, %c0_151] : memref<2x18x32xf32, #tpu.memory_space<vmem>>, vector<2x4x16xf32>
    tpu.vector_store %arg24[%c0_149, %c1_150, %c0_151], %116 {strides = array<i32>} : memref<2x18x32xf32, #tpu.memory_space<vmem>>, vector<2x4x16xf32>,
    %c0_152 = arith.constant 0 : index
    %c0_153 = arith.constant 0 : index
    %c0_154 = arith.constant 0 : index
    %121 = vector.load %arg24[%c0_152, %c0_153, %c0_154] : memref<2x18x32xf32, #tpu.memory_space<vmem>>, vector<2x4x16xf32>
    %c0_155 = arith.constant 0 : index
    %c1_156 = arith.constant 1 : index
    %c0_157 = arith.constant 0 : index
    %122 = vector.load %arg24[%c0_155, %c1_156, %c0_157] : memref<2x18x32xf32, #tpu.memory_space<vmem>>, vector<2x4x16xf32>
    %c0_158 = arith.constant 0 : index
    %c2_159 = arith.constant 2 : index
    %c0_160 = arith.constant 0 : index
    %123 = vector.load %arg24[%c0_158, %c2_159, %c0_160] : memref<2x18x32xf32, #tpu.memory_space<vmem>>, vector<2x4x16xf32>
    %124 = tpu.concatenate %121, %122, %123 in 2 : vector<2x4x16xf32>, vector<2x4x16xf32>, vector<2x4x16xf32> -> vector<2x4x48xf32>
    %125 = vector.shape_cast %124 : vector<2x4x48xf32> to vector<8x48xf32>
    %c0_161 = arith.constant 0 : index
    %c0_162 = arith.constant 0 : index
    %126 = vector.load %arg15[%c0_161, %c0_162] : memref<48x32xf32, #tpu.memory_space<vmem>>, vector<48x32xf32>
    %cst_163 = arith.constant dense<0.000000e+00> : vector<8x32xf32>
    %127 = tpu.matmul %125, %126, %cst_163 {dimension_numbers = #tpu.dot_dimension_numbers<[1], [0], [0], [1], [0, 0, 1, 1], [], []>} : vector<8x48xf32>, vector<48x32xf32>, vector<8x32xf32> -> vector<8x32xf32>
    %128 = vector.shape_cast %127 : vector<8x32xf32> to vector<2x4x32xf32>
    %c0_164 = arith.constant 0 : index
    %c0_165 = arith.constant 0 : index
    %c0_166 = arith.constant 0 : index
    %129 = vector.load %arg16[%c0_164, %c0_165, %c0_166] : memref<1x1x32xf32, #tpu.memory_space<vmem>>, vector<1x1x32xf32>
    %130 = vector.broadcast %129 : vector<1x1x32xf32> to vector<2x4x32xf32>
    %131 = arith.mulf %128, %130 : vector<2x4x32xf32>
    %c0_167 = arith.constant 0 : index
    %c0_168 = arith.constant 0 : index
    %c0_169 = arith.constant 0 : index
    %132 = vector.load %arg17[%c0_167, %c0_168, %c0_169] : memref<1x1x32xf32, #tpu.memory_space<vmem>>, vector<1x1x32xf32>
    %133 = vector.broadcast %132 : vector<1x1x32xf32> to vector<2x4x32xf32>
    %134 = arith.addf %131, %133 : vector<2x4x32xf32>
    %cst_170 = arith.constant 0.000000e+00 : f32
    %135 = vector.broadcast %cst_170 : f32 to vector<2x4x32xf32>
    %136 = arith.cmpf ogt, %134, %135 : vector<2x4x32xf32>
    %137 = math.exp %134 : vector<2x4x32xf32>
    %cst_171 = arith.constant 1.000000e+00 : f32
    %138 = vector.broadcast %cst_171 : f32 to vector<2x4x32xf32>
    %139 = arith.subf %137, %138 : vector<2x4x32xf32>
    %140 = arith.select %136, %134, %139 : vector<2x4x32xi1>, vector<2x4x32xf32>
    %cst_172 = arith.constant 0.000000e+00 : f32
    %141 = vector.broadcast %cst_172 : f32 to vector<2x1x32xf32>
    %c0_173 = arith.constant 0 : index
    %c0_174 = arith.constant 0 : index
    %c0_175 = arith.constant 0 : index
    %142 = vector.load %arg24[%c0_173, %c0_174, %c0_175] : memref<2x18x32xf32, #tpu.memory_space<vmem>>, vector<2x1x32xf32>
    tpu.vector_store %arg24[%c0_173, %c0_174, %c0_175], %141 {strides = array<i32>} : memref<2x18x32xf32, #tpu.memory_space<vmem>>, vector<2x1x32xf32>,
    %c0_176 = arith.constant 0 : index
    %c5_177 = arith.constant 5 : index
    %c0_178 = arith.constant 0 : index
    %143 = vector.load %arg24[%c0_176, %c5_177, %c0_178] : memref<2x18x32xf32, #tpu.memory_space<vmem>>, vector<2x1x32xf32>
    tpu.vector_store %arg24[%c0_176, %c5_177, %c0_178], %141 {strides = array<i32>} : memref<2x18x32xf32, #tpu.memory_space<vmem>>, vector<2x1x32xf32>,
    %c0_179 = arith.constant 0 : index
    %c1_180 = arith.constant 1 : index
    %c0_181 = arith.constant 0 : index
    %144 = vector.load %arg24[%c0_179, %c1_180, %c0_181] : memref<2x18x32xf32, #tpu.memory_space<vmem>>, vector<2x4x32xf32>
    tpu.vector_store %arg24[%c0_179, %c1_180, %c0_181], %140 {strides = array<i32>} : memref<2x18x32xf32, #tpu.memory_space<vmem>>, vector<2x4x32xf32>,
    %c0_182 = arith.constant 0 : index
    %c0_183 = arith.constant 0 : index
    %c0_184 = arith.constant 0 : index
    %145 = vector.load %arg24[%c0_182, %c0_183, %c0_184] : memref<2x18x32xf32, #tpu.memory_space<vmem>>, vector<2x4x32xf32>
    %c0_185 = arith.constant 0 : index
    %c1_186 = arith.constant 1 : index
    %c0_187 = arith.constant 0 : index
    %146 = vector.load %arg24[%c0_185, %c1_186, %c0_187] : memref<2x18x32xf32, #tpu.memory_space<vmem>>, vector<2x4x32xf32>
    %c0_188 = arith.constant 0 : index
    %c2_189 = arith.constant 2 : index
    %c0_190 = arith.constant 0 : index
    %147 = vector.load %arg24[%c0_188, %c2_189, %c0_190] : memref<2x18x32xf32, #tpu.memory_space<vmem>>, vector<2x4x32xf32>
    %148 = tpu.concatenate %145, %146, %147 in 2 : vector<2x4x32xf32>, vector<2x4x32xf32>, vector<2x4x32xf32> -> vector<2x4x96xf32>
    %149 = vector.shape_cast %148 : vector<2x4x96xf32> to vector<8x96xf32>
    %c0_191 = arith.constant 0 : index
    %c0_192 = arith.constant 0 : index
    %150 = vector.load %arg18[%c0_191, %c0_192] : memref<96x32xf32, #tpu.memory_space<vmem>>, vector<96x32xf32>
    %cst_193 = arith.constant dense<0.000000e+00> : vector<8x32xf32>
    %151 = tpu.matmul %149, %150, %cst_193 {dimension_numbers = #tpu.dot_dimension_numbers<[1], [0], [0], [1], [0, 0, 1, 1], [], []>} : vector<8x96xf32>, vector<96x32xf32>, vector<8x32xf32> -> vector<8x32xf32>
    %152 = vector.shape_cast %151 : vector<8x32xf32> to vector<2x4x32xf32>
    %c0_194 = arith.constant 0 : index
    %c0_195 = arith.constant 0 : index
    %c0_196 = arith.constant 0 : index
    %153 = vector.load %arg24[%c0_194, %c0_195, %c0_196] : memref<2x18x32xf32, #tpu.memory_space<vmem>>, vector<2x4x32xf32>
    tpu.vector_store %arg24[%c0_194, %c0_195, %c0_196], %152 {strides = array<i32>} : memref<2x18x32xf32, #tpu.memory_space<vmem>>, vector<2x4x32xf32>,
    %c0_197 = arith.constant 0 : index
    %c0_198 = arith.constant 0 : index
    %c0_199 = arith.constant 0 : index
    %154 = tpu.strided_load %arg24[%c0_197, %c0_198, %c0_199] {strides = array<i32: 1, 2, 1>} : memref<2x18x32xf32, #tpu.memory_space<vmem>>, vector<2x2x32xf32>
    %c0_200 = arith.constant 0 : index
    %c1_201 = arith.constant 1 : index
    %c0_202 = arith.constant 0 : index
    %155 = tpu.strided_load %arg24[%c0_200, %c1_201, %c0_202] {strides = array<i32: 1, 2, 1>} : memref<2x18x32xf32, #tpu.memory_space<vmem>>, vector<2x2x32xf32>
    %156 = arith.maximumf %154, %155 : vector<2x2x32xf32>
    %157 = vector.extract_strided_slice %156 {offsets = [0, 0, 0], sizes = [2, 1, 32], strides = [1, 1, 1]} : vector<2x2x32xf32> to vector<2x1x32xf32>
    %158 = vector.shape_cast %157 : vector<2x1x32xf32> to vector<2x32xf32>
    %159 = vector.extract_strided_slice %156 {offsets = [0, 1, 0], sizes = [2, 1, 32], strides = [1, 1, 1]} : vector<2x2x32xf32> to vector<2x1x32xf32>
    %160 = vector.shape_cast %159 : vector<2x1x32xf32> to vector<2x32xf32>
    %161 = tpu.concatenate %158, %160 in 1 : vector<2x32xf32>, vector<2x32xf32> -> vector<2x64xf32>
    %c0_203 = arith.constant 0 : index
    %c0_204 = arith.constant 0 : index
    %162 = vector.load %arg19[%c0_203, %c0_204] : memref<64x1024xf32, #tpu.memory_space<vmem>>, vector<64x1024xf32>
    %cst_205 = arith.constant dense<0.000000e+00> : vector<2x1024xf32>
    %163 = tpu.matmul %161, %162, %cst_205 {dimension_numbers = #tpu.dot_dimension_numbers<[1], [0], [0], [1], [0, 0, 1, 1], [], []>} : vector<2x64xf32>, vector<64x1024xf32>, vector<2x1024xf32> -> vector<2x1024xf32>
    %c0_206 = arith.constant 0 : index
    %c0_207 = arith.constant 0 : index
    %164 = vector.load %arg20[%c0_206, %c0_207] : memref<1x1024xf32, #tpu.memory_space<vmem>>, vector<1x1024xf32>
    %165 = vector.broadcast %164 : vector<1x1024xf32> to vector<2x1024xf32>
    %166 = arith.addf %163, %165 : vector<2x1024xf32>
    %cst_208 = arith.constant 0.000000e+00 : f32
    %167 = vector.broadcast %cst_208 : f32 to vector<2x1024xf32>
    %168 = arith.cmpf ogt, %166, %167 : vector<2x1024xf32>
    %169 = math.exp %166 : vector<2x1024xf32>
    %cst_209 = arith.constant 1.000000e+00 : f32
    %170 = vector.broadcast %cst_209 : f32 to vector<2x1024xf32>
    %171 = arith.subf %169, %170 : vector<2x1024xf32>
    %172 = arith.select %168, %166, %171 : vector<2x1024xi1>, vector<2x1024xf32>
    %c0_210 = arith.constant 0 : index
    %c0_211 = arith.constant 0 : index
    %173 = vector.load %arg21[%c0_210, %c0_211] : memref<1024x1xf32, #tpu.memory_space<vmem>>, vector<1024x1xf32>
    %cst_212 = arith.constant dense<0.000000e+00> : vector<2x1xf32>
    %174 = tpu.matmul %172, %173, %cst_212 {dimension_numbers = #tpu.dot_dimension_numbers<[1], [0], [0], [1], [0, 0, 1, 1], [], []>} : vector<2x1024xf32>, vector<1024x1xf32>, vector<2x1xf32> -> vector<2x1xf32>
    %c0_213 = arith.constant 0 : index
    %c0_214 = arith.constant 0 : index
    %175 = vector.load %arg22[%c0_213, %c0_214] : memref<1x1xf32, #tpu.memory_space<vmem>>, vector<1x1xf32>
    %176 = vector.broadcast %175 : vector<1x1xf32> to vector<2x1xf32>
    %177 = arith.addf %174, %176 : vector<2x1xf32>
    %cst_215 = arith.constant 0.000000e+00 : f32
    %178 = vector.broadcast %cst_215 : f32 to vector<2x1xf32>
    %179 = arith.subf %178, %177 : vector<2x1xf32>
    %180 = math.exp %179 : vector<2x1xf32>
    %cst_216 = arith.constant 1.000000e+00 : f32
    %181 = vector.broadcast %cst_216 : f32 to vector<2x1xf32>
    %182 = arith.addf %181, %180 : vector<2x1xf32>
    %cst_217 = arith.constant 1.000000e+00 : f32
    %183 = vector.broadcast %cst_217 : f32 to vector<2x1xf32>
    %184 = arith.divf %183, %182 : vector<2x1xf32>
    %c0_218 = arith.constant 0 : index
    %c0_219 = arith.constant 0 : index
    %185 = vector.load %arg23[%c0_218, %c0_219] : memref<2x1xf32, #tpu.memory_space<vmem>>, vector<2x1xf32>
    tpu.vector_store %arg23[%c0_218, %c0_219], %184 {strides = array<i32>} : memref<2x1xf32, #tpu.memory_space<vmem>>, vector<2x1xf32>,
    return
  }
}

</mosaic_0001>

<llo_original>
// kernel: sconv1d_2_forward.1
$region0: #{sconv1d_2_forward.1}
  #allocation0 [shape = 'u32[]', space=smem, size = 0x4, offset = 0x4, fixed_abs, tag = 'smem constant byte address 0x4 - core index']
  #allocation1 [shape = 'u32[144,128]{1,0:T(1,128)}', space=vmem, size = 0x12000, scoped, tag = 'internal scratch']
  #allocation2 [shape = 'f32[2,18,32]{2,1,0:T(8,128)}', space=vmem, size = 0x6000, scoped, tag = 'scratch operand']
  #allocation3 [shape = 'f32[1,1]{1,0:T(1,128)S(1)}', space=vmem, size = 0x200, scoped, tag = 'scoped memory for sconv1d_2_forward.1']
  %s0 = inlined_call_operand.vmem [shape: f32[2,16,4], index: 0, kind: input, shape index: {}]
  %s1 = inlined_call_operand.vmem [shape: f32[1,1,4], index: 1, kind: input, shape index: {}]
  %s2 = inlined_call_operand.vmem [shape: f32[1,1,4], index: 2, kind: input, shape index: {}]
  %s3 = inlined_call_operand.vmem [shape: f32[12,8], index: 3, kind: input, shape index: {}]
  %s4 = inlined_call_operand.vmem [shape: f32[1,1,8], index: 4, kind: input, shape index: {}]
  %s5 = inlined_call_operand.vmem [shape: f32[1,1,8], index: 5, kind: input, shape index: {}]
  %s6 = inlined_call_operand.vmem [shape: f32[24,8], index: 6, kind: input, shape index: {}]
  %s7 = inlined_call_operand.vmem [shape: f32[1,1,8], index: 7, kind: input, shape index: {}]
  %s8 = inlined_call_operand.vmem [shape: f32[1,1,8], index: 8, kind: input, shape index: {}]
  %s9 = inlined_call_operand.vmem [shape: f32[24,16], index: 9, kind: input, shape index: {}]
  %s10 = inlined_call_operand.vmem [shape: f32[1,1,16], index: 10, kind: input, shape index: {}]
  %s11 = inlined_call_operand.vmem [shape: f32[1,1,16], index: 11, kind: input, shape index: {}]
  %s12 = inlined_call_operand.vmem [shape: f32[48,16], index: 12, kind: input, shape index: {}]
  %s13 = inlined_call_operand.vmem [shape: f32[1,1,16], index: 13, kind: input, shape index: {}]
  %s14 = inlined_call_operand.vmem [shape: f32[1,1,16], index: 14, kind: input, shape index: {}]
  %s15 = inlined_call_operand.vmem [shape: f32[48,32], index: 15, kind: input, shape index: {}]
  %s16 = inlined_call_operand.vmem [shape: f32[1,1,32], index: 16, kind: input, shape index: {}]
  %s17 = inlined_call_operand.vmem [shape: f32[1,1,32], index: 17, kind: input, shape index: {}]
  %s18 = inlined_call_operand.vmem [shape: f32[96,32], index: 18, kind: input, shape index: {}]
  %s19 = inlined_call_operand.vmem [shape: f32[64,1024], index: 19, kind: input, shape index: {}]
  %s20 = inlined_call_operand.vmem [shape: f32[1,1024], index: 20, kind: input, shape index: {}]
  %s21 = inlined_call_operand.vmem [shape: f32[1024,1], index: 21, kind: input, shape index: {}]
  %s22 = inlined_call_operand.<no memory space> [shape: f32[1,1], index: 22, kind: input, shape index: {}]
  %s23 = inlined_call_operand.vmem [shape: f32[2,1], index: 23, kind: output, shape index: {}]
  %s24 = sld [smem:[#allocation0]]
  $region102: #{sconv1d_2_forward.1} parent=0
    _
  %s26 = ssub.s32 1, %s24
  %s27 = scalar_select 0, %s26, %s24
  %v28 = vstv %s22
  %29 = vst [vmem:[#allocation3] sm:$0x1] %v28
  // Predicated region
  $region2: #{sconv1d_2_forward.1} parent=0 // pred_check
    _
  $region3: #{sconv1d_2_forward.1} parent=0 // pred_check_branch
    %31 = sbr.rel (0) target = $region5
  $region4: #{sconv1d_2_forward.1} parent=0 // pred_region
    _
  $region5: #{sconv1d_2_forward.1} parent=0 // pred_fallthru
    _
  // Predicated region
  $region6: #{sconv1d_2_forward.1} parent=0 // pred_check
    _
  $region7: #{sconv1d_2_forward.1} parent=0 // pred_check_branch
    %33 = sbr.rel (0) target = $region9
  $region8: #{sconv1d_2_forward.1} parent=0 // pred_region
    _
  $region9: #{sconv1d_2_forward.1} parent=0 // pred_fallthru
    _
  // Predicated region
  $region10: #{sconv1d_2_forward.1} parent=0 // pred_check
    _
  $region11: #{sconv1d_2_forward.1} parent=0 // pred_check_branch
    %35 = sbr.rel (0) target = $region13
  $region12: #{sconv1d_2_forward.1} parent=0 // pred_region
    _
  $region13: #{sconv1d_2_forward.1} parent=0 // pred_fallthru
    _
  // Predicated region
  $region14: #{sconv1d_2_forward.1} parent=0 // pred_check
    _
  $region15: #{sconv1d_2_forward.1} parent=0 // pred_check_branch
    %37 = sbr.rel (0) target = $region17
  $region16: #{sconv1d_2_forward.1} parent=0 // pred_region
    _
  $region17: #{sconv1d_2_forward.1} parent=0 // pred_fallthru
    _
  // Predicated region
  $region18: #{sconv1d_2_forward.1} parent=0 // pred_check
    _
  $region19: #{sconv1d_2_forward.1} parent=0 // pred_check_branch
    %39 = sbr.rel (0) target = $region21
  $region20: #{sconv1d_2_forward.1} parent=0 // pred_region
    _
  $region21: #{sconv1d_2_forward.1} parent=0 // pred_fallthru
    _
  // Predicated region
  $region22: #{sconv1d_2_forward.1} parent=0 // pred_check
    _
  $region23: #{sconv1d_2_forward.1} parent=0 // pred_check_branch
    %41 = sbr.rel (0) target = $region25
  $region24: #{sconv1d_2_forward.1} parent=0 // pred_region
    _
  $region25: #{sconv1d_2_forward.1} parent=0 // pred_fallthru
    _
  // Predicated region
  $region26: #{sconv1d_2_forward.1} parent=0 // pred_check
    _
  $region27: #{sconv1d_2_forward.1} parent=0 // pred_check_branch
    %43 = sbr.rel (0) target = $region29
  $region28: #{sconv1d_2_forward.1} parent=0 // pred_region
    _
  $region29: #{sconv1d_2_forward.1} parent=0 // pred_fallthru
    _
  // Predicated region
  $region30: #{sconv1d_2_forward.1} parent=0 // pred_check
    _
  $region31: #{sconv1d_2_forward.1} parent=0 // pred_check_branch
    %45 = sbr.rel (0) target = $region33
  $region32: #{sconv1d_2_forward.1} parent=0 // pred_region
    _
  $region33: #{sconv1d_2_forward.1} parent=0 // pred_fallthru
    _
  // Predicated region
  $region34: #{sconv1d_2_forward.1} parent=0 // pred_check
    _
  $region35: #{sconv1d_2_forward.1} parent=0 // pred_check_branch
    %47 = sbr.rel (0) target = $region37
  $region36: #{sconv1d_2_forward.1} parent=0 // pred_region
    _
  $region37: #{sconv1d_2_forward.1} parent=0 // pred_fallthru
    _
  // Predicated region
  $region38: #{sconv1d_2_forward.1} parent=0 // pred_check
    _
  $region39: #{sconv1d_2_forward.1} parent=0 // pred_check_branch
    %49 = sbr.rel (0) target = $region41
  $region40: #{sconv1d_2_forward.1} parent=0 // pred_region
    _
  $region41: #{sconv1d_2_forward.1} parent=0 // pred_fallthru
    _
  // Predicated region
  $region42: #{sconv1d_2_forward.1} parent=0 // pred_check
    _
  $region43: #{sconv1d_2_forward.1} parent=0 // pred_check_branch
    %51 = sbr.rel (0) target = $region45
  $region44: #{sconv1d_2_forward.1} parent=0 // pred_region
    _
  $region45: #{sconv1d_2_forward.1} parent=0 // pred_fallthru
    _
  // Predicated region
  $region46: #{sconv1d_2_forward.1} parent=0 // pred_check
    _
  $region47: #{sconv1d_2_forward.1} parent=0 // pred_check_branch
    %53 = sbr.rel (0) target = $region49
  $region48: #{sconv1d_2_forward.1} parent=0 // pred_region
    _
  $region49: #{sconv1d_2_forward.1} parent=0 // pred_fallthru
    _
  // Predicated region
  $region50: #{sconv1d_2_forward.1} parent=0 // pred_check
    _
  $region51: #{sconv1d_2_forward.1} parent=0 // pred_check_branch
    %55 = sbr.rel (0) target = $region53
  $region52: #{sconv1d_2_forward.1} parent=0 // pred_region
    _
  $region53: #{sconv1d_2_forward.1} parent=0 // pred_fallthru
    _
  // Predicated region
  $region54: #{sconv1d_2_forward.1} parent=0 // pred_check
    _
  $region55: #{sconv1d_2_forward.1} parent=0 // pred_check_branch
    %57 = sbr.rel (0) target = $region57
  $region56: #{sconv1d_2_forward.1} parent=0 // pred_region
    _
  $region57: #{sconv1d_2_forward.1} parent=0 // pred_fallthru
    _
  // Predicated region
  $region58: #{sconv1d_2_forward.1} parent=0 // pred_check
    _
  $region59: #{sconv1d_2_forward.1} parent=0 // pred_check_branch
    %59 = sbr.rel (0) target = $region61
  $region60: #{sconv1d_2_forward.1} parent=0 // pred_region
    _
  $region61: #{sconv1d_2_forward.1} parent=0 // pred_fallthru
    _
  // Predicated region
  $region62: #{sconv1d_2_forward.1} parent=0 // pred_check
    _
  $region63: #{sconv1d_2_forward.1} parent=0 // pred_check_branch
    %61 = sbr.rel (0) target = $region65
  $region64: #{sconv1d_2_forward.1} parent=0 // pred_region
    _
  $region65: #{sconv1d_2_forward.1} parent=0 // pred_fallthru
    _
  // Predicated region
  $region66: #{sconv1d_2_forward.1} parent=0 // pred_check
    _
  $region67: #{sconv1d_2_forward.1} parent=0 // pred_check_branch
    %63 = sbr.rel (0) target = $region69
  $region68: #{sconv1d_2_forward.1} parent=0 // pred_region
    _
  $region69: #{sconv1d_2_forward.1} parent=0 // pred_fallthru
    _
  // Predicated region
  $region70: #{sconv1d_2_forward.1} parent=0 // pred_check
    _
  $region71: #{sconv1d_2_forward.1} parent=0 // pred_check_branch
    %65 = sbr.rel (0) target = $region73
  $region72: #{sconv1d_2_forward.1} parent=0 // pred_region
    _
  $region73: #{sconv1d_2_forward.1} parent=0 // pred_fallthru
    _
  // Predicated region
  $region74: #{sconv1d_2_forward.1} parent=0 // pred_check
    _
  $region75: #{sconv1d_2_forward.1} parent=0 // pred_check_branch
    %67 = sbr.rel (0) target = $region77
  $region76: #{sconv1d_2_forward.1} parent=0 // pred_region
    _
  $region77: #{sconv1d_2_forward.1} parent=0 // pred_fallthru
    _
  // Predicated region
  $region78: #{sconv1d_2_forward.1} parent=0 // pred_check
    _
  $region79: #{sconv1d_2_forward.1} parent=0 // pred_check_branch
    %69 = sbr.rel (0) target = $region81
  $region80: #{sconv1d_2_forward.1} parent=0 // pred_region
    _
  $region81: #{sconv1d_2_forward.1} parent=0 // pred_fallthru
    _
  // Predicated region
  $region82: #{sconv1d_2_forward.1} parent=0 // pred_check
    _
  $region83: #{sconv1d_2_forward.1} parent=0 // pred_check_branch
    %71 = sbr.rel (0) target = $region85
  $region84: #{sconv1d_2_forward.1} parent=0 // pred_region
    _
  $region85: #{sconv1d_2_forward.1} parent=0 // pred_fallthru
    _
  // Predicated region
  $region86: #{sconv1d_2_forward.1} parent=0 // pred_check
    _
  $region87: #{sconv1d_2_forward.1} parent=0 // pred_check_branch
    %73 = sbr.rel (0) target = $region89
  $region88: #{sconv1d_2_forward.1} parent=0 // pred_region
    _
  $region89: #{sconv1d_2_forward.1} parent=0 // pred_fallthru
    _
  // Predicated region
  $region90: #{sconv1d_2_forward.1} parent=0 // pred_check
    _
  $region91: #{sconv1d_2_forward.1} parent=0 // pred_check_branch
    %75 = sbr.rel (0) target = $region93
  $region92: #{sconv1d_2_forward.1} parent=0 // pred_region
    _
  $region93: #{sconv1d_2_forward.1} parent=0 // pred_fallthru
    _
  %v76 = vld [vmem:[%s0] sm:$0xff]
  %v77 = vld [vmem:[%s0 + $0x8] sm:$0xff]
  %v78 = vld [vmem:[%s0 + $0x10] sm:$0xff]
  %v79 = vld [vmem:[%s0 + $0x18] sm:$0xff]
  %v80 = vld [vmem:[%s1] sm:$0x1]
  %v82 = vlaneseq
  %v83 = vshrl.u32 %v82, 7
  %v84 = vsub.s32 0, %v83
  %v85 = vrot.slane %v80, %v84
  %v87 = vmul.f32 %v76, %v85
  %v88 = vmul.f32 %v77, %v85
  %v89 = vmul.f32 %v78, %v85
  %v90 = vmul.f32 %v79, %v85
  %v91 = vld [vmem:[%s2] sm:$0x1]
  %v93 = vlaneseq
  %v94 = vshrl.u32 %v93, 7
  %v95 = vsub.s32 0, %v94
  %v96 = vrot.slane %v91, %v95
  %v98 = vadd.f32 %v87, %v96
  %v99 = vadd.f32 %v88, %v96
  %v100 = vadd.f32 %v89, %v96
  %v101 = vadd.f32 %v90, %v96
  %vm102 = vcmp.gt.f32.partialorder %v98, 0.0
  %vm103 = vcmp.gt.f32.partialorder %v99, 0.0
  %vm104 = vcmp.gt.f32.partialorder %v100, 0.0
  %vm105 = vcmp.gt.f32.partialorder %v101, 0.0
  %v106 = vmul.f32 %v98, 1.442695
  %v107 = vpow.pop %v106
  %v108 = vmul.f32 %v99, 1.442695
  %v109 = vpow.pop %v108
  %v110 = vmul.f32 %v100, 1.442695
  %v111 = vpow.pop %v110
  %v112 = vmul.f32 %v101, 1.442695
  %v113 = vpow.pop %v112
  %v114 = vsub.f32 %v107, 1.0
  %v115 = vsub.f32 %v109, 1.0
  %v116 = vsub.f32 %v111, 1.0
  %v117 = vsub.f32 %v113, 1.0
  %v118 = vsel %vm102, %v98, %v114
  %v119 = vsel %vm103, %v99, %v115
  %v120 = vsel %vm104, %v100, %v116
  %v121 = vsel %vm105, %v101, %v117
  %vm122 = vcmask 24576
  %123 = vst.msk [vmem:[#allocation2] sm:$0x1] %vm122, 0.0
  %124 = vst.msk [vmem:[#allocation2 + $0x18] sm:$0x1] %vm122, 0.0
  %125 = vst.msk [vmem:[#allocation2 + $0x11] sm:$0x1] %vm122, 0.0
  %126 = vst.msk [vmem:[#allocation2 + $0x29] sm:$0x1] %vm122, 0.0
  %vm127 = vcmask 31744
  %128 = vst.msk [vmem:[#allocation2 + $0x1] sm:$0xff] %vm127, %v118
  %129 = vst.msk [vmem:[#allocation2 + $0x9] sm:$0xff] %vm127, %v119
  %130 = vst.msk [vmem:[#allocation2 + $0x19] sm:$0xff] %vm127, %v120
  %131 = vst.msk [vmem:[#allocation2 + $0x21] sm:$0xff] %vm127, %v121
  %v132 = vld [vmem:[#allocation2] sm:$0xff]
  %v133 = vld [vmem:[#allocation2 + $0x8] sm:$0xff]
  %v134 = vld [vmem:[#allocation2 + $0x18] sm:$0xff]
  %v135 = vld [vmem:[#allocation2 + $0x20] sm:$0xff]
  %v136 = vld [vmem:[#allocation2 + $0x1] sm:$0xff]
  %v137 = vld [vmem:[#allocation2 + $0x9] sm:$0xff]
  %v138 = vld [vmem:[#allocation2 + $0x19] sm:$0xff]
  %v139 = vld [vmem:[#allocation2 + $0x21] sm:$0xff]
  %v140 = vld [vmem:[#allocation2 + $0x2] sm:$0xff]
  %v141 = vld [vmem:[#allocation2 + $0xa] sm:$0xff]
  %v142 = vld [vmem:[#allocation2 + $0x1a] sm:$0xff]
  %v143 = vld [vmem:[#allocation2 + $0x22] sm:$0xff]
  %148 = vrot.lane.b32.xlu0 %v136, 4
  %v149 = vpop.permute.xlu0 %148
  %150 = vrot.lane.b32.xlu0 %v137, 4
  %v151 = vpop.permute.xlu0 %150
  %152 = vrot.lane.b32.xlu0 %v138, 4
  %v153 = vpop.permute.xlu0 %152
  %154 = vrot.lane.b32.xlu0 %v139, 4
  %v155 = vpop.permute.xlu0 %154
  %164 = vrot.lane.b32.xlu0 %v140, 8
  %v165 = vpop.permute.xlu0 %164
  %166 = vrot.lane.b32.xlu0 %v141, 8
  %v167 = vpop.permute.xlu0 %166
  %168 = vrot.lane.b32.xlu0 %v142, 8
  %v169 = vpop.permute.xlu0 %168
  %170 = vrot.lane.b32.xlu0 %v143, 8
  %v171 = vpop.permute.xlu0 %170
  %v176 = vsel %vm127, %v132, %v149
  %v177 = vsel %vm127, %v133, %v151
  %v178 = vsel %vm127, %v134, %v153
  %v179 = vsel %vm127, %v135, %v155
  %vm180 = vcmask 64512
  %v181 = vsel %vm180, %v176, %v165
  %v182 = vsel %vm180, %v177, %v167
  %v183 = vsel %vm180, %v178, %v169
  %v184 = vsel %vm180, %v179, %v171
  %v185 = vld [vmem:[%s3] sm:$0xff]
  %v186 = vld [vmem:[%s3 + $0x8] sm:$0xf]
  %vm187 = vcmask 97280
  %v189 = vsel %vm187, %v181, 0
  %v192 = vsel %vm187, %v182, 0
  %v195 = vsel %vm187, %v183, 0
  %v198 = vsel %vm187, %v184, 0
  %vm200 = vcmask 1043456
  %v202 = vsel %vm200, %v186, 0
  %204 = vmatprep.subr.mxu0 0.0
  %205 = vmatpush1.msra.mxu0 0.0
  %206 = vmatprep.subr.mxu0 0.0
  %207 = vmatpush1.msra.mxu0 0.0
  %208 = vmatprep.subr.mxu0 0.0
  %209 = vmatpush1.msra.mxu0 0.0
  %210 = vmatprep.subr.mxu0 0.0
  %211 = vmatpush1.msra.mxu0 0.0
  %212 = vmatprep.subr.mxu0 0.0
  %213 = vmatpush1.msra.mxu0 0.0
  %214 = vmatprep.subr.mxu0 0.0
  %215 = vmatpush1.msra.mxu0 0.0
  %216 = vmatprep.subr.mxu0 0.0
  %217 = vmatpush1.msra.mxu0 0.0
  %218 = vmatprep.subr.mxu0 0.0
  %219 = vmatpush1.msra.mxu0 0.0
  %220 = vmatprep.subr.mxu0 0.0
  %221 = vmatpush1.msra.mxu0 0.0
  %222 = vmatprep.subr.mxu0 0.0
  %223 = vmatpush1.msra.mxu0 0.0
  %224 = vmatprep.subr.mxu0 0.0
  %225 = vmatpush1.msra.mxu0 0.0
  %226 = vmatprep.subr.mxu0 0.0
  %227 = vmatpush1.msra.mxu0 0.0
  %228 = vmatprep.subr.mxu0 0.0
  %229 = vmatpush1.msra.mxu0 0.0
  %230 = vmatprep.subr.mxu0 0.0
  %231 = vmatpush1.msra.mxu0 0.0
  %232 = vmatprep.subr.mxu0 0.0
  %233 = vmatpush1.msra.mxu0 %v202
  %234 = vmatprep.subr.mxu0 0.0
  %235 = vmatpush1.msra.mxu0 %v185
  %236 = vmatprep.subr.mxu0 0.0
  %237 = vmatpush2.msra.mxu0 0.0
  %238 = vmatprep.subr.mxu0 0.0
  %239 = vmatpush2.msra.mxu0 0.0
  %240 = vmatprep.subr.mxu0 0.0
  %241 = vmatpush2.msra.mxu0 0.0
  %242 = vmatprep.subr.mxu0 0.0
  %243 = vmatpush2.msra.mxu0 0.0
  %244 = vmatprep.subr.mxu0 0.0
  %245 = vmatpush2.msra.mxu0 0.0
  %246 = vmatprep.subr.mxu0 0.0
  %247 = vmatpush2.msra.mxu0 0.0
  %248 = vmatprep.subr.mxu0 0.0
  %249 = vmatpush2.msra.mxu0 0.0
  %250 = vmatprep.subr.mxu0 0.0
  %251 = vmatpush2.msra.mxu0 0.0
  %252 = vmatprep.subr.mxu0 0.0
  %253 = vmatpush2.msra.mxu0 0.0
  %254 = vmatprep.subr.mxu0 0.0
  %255 = vmatpush2.msra.mxu0 0.0
  %256 = vmatprep.subr.mxu0 0.0
  %257 = vmatpush2.msra.mxu0 0.0
  %258 = vmatprep.subr.mxu0 0.0
  %259 = vmatpush2.msra.mxu0 0.0
  %260 = vmatprep.subr.mxu0 0.0
  %261 = vmatpush2.msra.mxu0 0.0
  %262 = vmatprep.subr.mxu0 0.0
  %263 = vmatpush2.msra.mxu0 0.0
  %264 = vmatprep.subr.mxu0 0.0
  %265 = vmatpush2.msra.mxu0 0.0
  %266 = vmatprep.subr.mxu0 0.0
  %267 = vmatpush2.msra.mxu0 0.0
  %268 = vmatprep.mubr.f32.mxu0 0.0
  %269 = vmatmul.mubr.f32.gmra.mxu0 %v189
  %v270 = vpop.f32.mrf.mxu0
  %v271 = vadd.f32 0.0, %v270
  %v272 = vpop.f32.mrf.mxu0
  %273 = vmatprep.mubr.f32.mxu0 0.0
  %274 = vmatmul.mubr.f32.gmra.mxu0 %v192
  %v275 = vpop.f32.mrf.mxu0
  %v276 = vadd.f32 0.0, %v275
  %v277 = vpop.f32.mrf.mxu0
  %278 = vmatprep.mubr.f32.mxu0 0.0
  %279 = vmatmul.mubr.f32.gmra.mxu0 %v195
  %v280 = vpop.f32.mrf.mxu0
  %v281 = vadd.f32 0.0, %v280
  %v282 = vpop.f32.mrf.mxu0
  %283 = vmatprep.mubr.f32.mxu0 0.0
  %284 = vmatmul.mubr.f32.gmra.mxu0 %v198
  %v285 = vpop.f32.mrf.mxu0
  %v286 = vadd.f32 0.0, %v285
  %v287 = vpop.f32.mrf.mxu0
  %288 = vdwg.mxu0
  %v289 = vld [vmem:[%s4] sm:$0x1]
  %v291 = vlaneseq
  %v292 = vshrl.u32 %v291, 7
  %v293 = vsub.s32 0, %v292
  %v294 = vrot.slane %v289, %v293
  %v296 = vmul.f32 %v271, %v294
  %v297 = vmul.f32 %v276, %v294
  %v298 = vmul.f32 %v281, %v294
  %v299 = vmul.f32 %v286, %v294
  %v300 = vld [vmem:[%s5] sm:$0x1]
  %v302 = vlaneseq
  %v303 = vshrl.u32 %v302, 7
  %v304 = vsub.s32 0, %v303
  %v305 = vrot.slane %v300, %v304
  %v307 = vadd.f32 %v296, %v305
  %v308 = vadd.f32 %v297, %v305
  %v309 = vadd.f32 %v298, %v305
  %v310 = vadd.f32 %v299, %v305
  %vm311 = vcmp.gt.f32.partialorder %v307, 0.0
  %vm312 = vcmp.gt.f32.partialorder %v308, 0.0
  %vm313 = vcmp.gt.f32.partialorder %v309, 0.0
  %vm314 = vcmp.gt.f32.partialorder %v310, 0.0
  %v315 = vmul.f32 %v307, 1.442695
  %v316 = vpow.pop %v315
  %v317 = vmul.f32 %v308, 1.442695
  %v318 = vpow.pop %v317
  %v319 = vmul.f32 %v309, 1.442695
  %v320 = vpow.pop %v319
  %v321 = vmul.f32 %v310, 1.442695
  %v322 = vpow.pop %v321
  %v323 = vsub.f32 %v316, 1.0
  %v324 = vsub.f32 %v318, 1.0
  %v325 = vsub.f32 %v320, 1.0
  %v326 = vsub.f32 %v322, 1.0
  %v327 = vsel %vm311, %v307, %v323
  %v328 = vsel %vm312, %v308, %v324
  %v329 = vsel %vm313, %v309, %v325
  %v330 = vsel %vm314, %v310, %v326
  %vm331 = vcmask 57344
  %332 = vst.msk [vmem:[#allocation2] sm:$0x1] %vm331, 0.0
  %333 = vst.msk [vmem:[#allocation2 + $0x18] sm:$0x1] %vm331, 0.0
  %334 = vst.msk [vmem:[#allocation2 + $0x11] sm:$0x1] %vm331, 0.0
  %335 = vst.msk [vmem:[#allocation2 + $0x29] sm:$0x1] %vm331, 0.0
  %336 = vst.msk [vmem:[#allocation2 + $0x1] sm:$0xff] %vm180, %v327
  %337 = vst.msk [vmem:[#allocation2 + $0x9] sm:$0xff] %vm180, %v328
  %338 = vst.msk [vmem:[#allocation2 + $0x19] sm:$0xff] %vm180, %v329
  %339 = vst.msk [vmem:[#allocation2 + $0x21] sm:$0xff] %vm180, %v330
  %v340 = vld [vmem:[#allocation2] sm:$0xff]
  %v341 = vld [vmem:[#allocation2 + $0x8] sm:$0xff]
  %v342 = vld [vmem:[#allocation2 + $0x18] sm:$0xff]
  %v343 = vld [vmem:[#allocation2 + $0x20] sm:$0xff]
  %v344 = vld [vmem:[#allocation2 + $0x1] sm:$0xff]
  %v345 = vld [vmem:[#allocation2 + $0x9] sm:$0xff]
  %v346 = vld [vmem:[#allocation2 + $0x19] sm:$0xff]
  %v347 = vld [vmem:[#allocation2 + $0x21] sm:$0xff]
  %v348 = vld [vmem:[#allocation2 + $0x2] sm:$0xff]
  %v349 = vld [vmem:[#allocation2 + $0xa] sm:$0xff]
  %v350 = vld [vmem:[#allocation2 + $0x1a] sm:$0xff]
  %v351 = vld [vmem:[#allocation2 + $0x22] sm:$0xff]
  %356 = vrot.lane.b32.xlu0 %v344, 8
  %v357 = vpop.permute.xlu0 %356
  %358 = vrot.lane.b32.xlu0 %v345, 8
  %v359 = vpop.permute.xlu0 %358
  %360 = vrot.lane.b32.xlu0 %v346, 8
  %v361 = vpop.permute.xlu0 %360
  %362 = vrot.lane.b32.xlu0 %v347, 8
  %v363 = vpop.permute.xlu0 %362
  %372 = vrot.lane.b32.xlu0 %v348, 16
  %v373 = vpop.permute.xlu0 %372
  %374 = vrot.lane.b32.xlu0 %v349, 16
  %v375 = vpop.permute.xlu0 %374
  %376 = vrot.lane.b32.xlu0 %v350, 16
  %v377 = vpop.permute.xlu0 %376
  %378 = vrot.lane.b32.xlu0 %v351, 16
  %v379 = vpop.permute.xlu0 %378
  %v384 = vsel %vm180, %v340, %v357
  %v385 = vsel %vm180, %v341, %v359
  %v386 = vsel %vm180, %v342, %v361
  %v387 = vsel %vm180, %v343, %v363
  %vm388 = vcmask 130048
  %v389 = vsel %vm388, %v384, %v373
  %v390 = vsel %vm388, %v385, %v375
  %v391 = vsel %vm388, %v386, %v377
  %v392 = vsel %vm388, %v387, %v379
  %v393 = vld [vmem:[%s6] sm:$0xff]
  %v394 = vld [vmem:[%s6 + $0x8] sm:$0xff]
  %v395 = vld [vmem:[%s6 + $0x10] sm:$0xff]
  %vm396 = vcmask 195584
  %v398 = vsel %vm396, %v389, 0
  %v401 = vsel %vm396, %v390, 0
  %v404 = vsel %vm396, %v391, 0
  %v407 = vsel %vm396, %v392, 0
  %409 = vmatprep.subr.mxu0 0.0
  %410 = vmatpush1.msra.mxu0 0.0
  %411 = vmatprep.subr.mxu0 0.0
  %412 = vmatpush1.msra.mxu0 0.0
  %413 = vmatprep.subr.mxu0 0.0
  %414 = vmatpush1.msra.mxu0 0.0
  %415 = vmatprep.subr.mxu0 0.0
  %416 = vmatpush1.msra.mxu0 0.0
  %417 = vmatprep.subr.mxu0 0.0
  %418 = vmatpush1.msra.mxu0 0.0
  %419 = vmatprep.subr.mxu0 0.0
  %420 = vmatpush1.msra.mxu0 0.0
  %421 = vmatprep.subr.mxu0 0.0
  %422 = vmatpush1.msra.mxu0 0.0
  %423 = vmatprep.subr.mxu0 0.0
  %424 = vmatpush1.msra.mxu0 0.0
  %425 = vmatprep.subr.mxu0 0.0
  %426 = vmatpush1.msra.mxu0 0.0
  %427 = vmatprep.subr.mxu0 0.0
  %428 = vmatpush1.msra.mxu0 0.0
  %429 = vmatprep.subr.mxu0 0.0
  %430 = vmatpush1.msra.mxu0 0.0
  %431 = vmatprep.subr.mxu0 0.0
  %432 = vmatpush1.msra.mxu0 0.0
  %433 = vmatprep.subr.mxu0 0.0
  %434 = vmatpush1.msra.mxu0 0.0
  %435 = vmatprep.subr.mxu0 0.0
  %436 = vmatpush1.msra.mxu0 %v395
  %437 = vmatprep.subr.mxu0 0.0
  %438 = vmatpush1.msra.mxu0 %v394
  %439 = vmatprep.subr.mxu0 0.0
  %440 = vmatpush1.msra.mxu0 %v393
  %441 = vmatprep.subr.mxu0 0.0
  %442 = vmatpush2.msra.mxu0 0.0
  %443 = vmatprep.subr.mxu0 0.0
  %444 = vmatpush2.msra.mxu0 0.0
  %445 = vmatprep.subr.mxu0 0.0
  %446 = vmatpush2.msra.mxu0 0.0
  %447 = vmatprep.subr.mxu0 0.0
  %448 = vmatpush2.msra.mxu0 0.0
  %449 = vmatprep.subr.mxu0 0.0
  %450 = vmatpush2.msra.mxu0 0.0
  %451 = vmatprep.subr.mxu0 0.0
  %452 = vmatpush2.msra.mxu0 0.0
  %453 = vmatprep.subr.mxu0 0.0
  %454 = vmatpush2.msra.mxu0 0.0
  %455 = vmatprep.subr.mxu0 0.0
  %456 = vmatpush2.msra.mxu0 0.0
  %457 = vmatprep.subr.mxu0 0.0
  %458 = vmatpush2.msra.mxu0 0.0
  %459 = vmatprep.subr.mxu0 0.0
  %460 = vmatpush2.msra.mxu0 0.0
  %461 = vmatprep.subr.mxu0 0.0
  %462 = vmatpush2.msra.mxu0 0.0
  %463 = vmatprep.subr.mxu0 0.0
  %464 = vmatpush2.msra.mxu0 0.0
  %465 = vmatprep.subr.mxu0 0.0
  %466 = vmatpush2.msra.mxu0 0.0
  %467 = vmatprep.subr.mxu0 0.0
  %468 = vmatpush2.msra.mxu0 0.0
  %469 = vmatprep.subr.mxu0 0.0
  %470 = vmatpush2.msra.mxu0 0.0
  %471 = vmatprep.subr.mxu0 0.0
  %472 = vmatpush2.msra.mxu0 0.0
  %473 = vmatprep.mubr.f32.mxu0 0.0
  %474 = vmatmul.mubr.f32.gmra.mxu0 %v398
  %v475 = vpop.f32.mrf.mxu0
  %v476 = vadd.f32 0.0, %v475
  %v477 = vpop.f32.mrf.mxu0
  %478 = vmatprep.mubr.f32.mxu0 0.0
  %479 = vmatmul.mubr.f32.gmra.mxu0 %v401
  %v480 = vpop.f32.mrf.mxu0
  %v481 = vadd.f32 0.0, %v480
  %v482 = vpop.f32.mrf.mxu0
  %483 = vmatprep.mubr.f32.mxu0 0.0
  %484 = vmatmul.mubr.f32.gmra.mxu0 %v404
  %v485 = vpop.f32.mrf.mxu0
  %v486 = vadd.f32 0.0, %v485
  %v487 = vpop.f32.mrf.mxu0
  %488 = vmatprep.mubr.f32.mxu0 0.0
  %489 = vmatmul.mubr.f32.gmra.mxu0 %v407
  %v490 = vpop.f32.mrf.mxu0
  %v491 = vadd.f32 0.0, %v490
  %v492 = vpop.f32.mrf.mxu0
  %493 = vdwg.mxu0
  %494 = vst.msk [vmem:[#allocation2] sm:$0xff] %vm180, %v476
  %495 = vst.msk [vmem:[#allocation2 + $0x8] sm:$0xff] %vm180, %v481
  %496 = vst.msk [vmem:[#allocation2 + $0x18] sm:$0xff] %vm180, %v486
  %497 = vst.msk [vmem:[#allocation2 + $0x20] sm:$0xff] %vm180, %v491
  %v498 = vld [vmem:[#allocation2] ss:$2 sm:$0xff]
  %s499 = scalar_lea.vmem [#allocation2], 24
  %v500 = vld [vmem:[%s499] ss:$2 sm:$0xff]
  %s501 = scalar_lea.vmem [#allocation2], 1
  %v502 = vld [vmem:[%s501] ss:$2 sm:$0xff]
  %s503 = scalar_lea.vmem [#allocation2], 25
  %v504 = vld [vmem:[%s503] ss:$2 sm:$0xff]
  %v505 = vmax.f32 %v498, %v502
  %v506 = vmax.f32 %v500, %v504
  %v507 = vld [vmem:[%s7] sm:$0x1]
  %v509 = vlaneseq
  %v510 = vshrl.u32 %v509, 7
  %v511 = vsub.s32 0, %v510
  %v512 = vrot.slane %v507, %v511
  %v514 = vmul.f32 %v505, %v512
  %v515 = vmul.f32 %v506, %v512
  %v516 = vld [vmem:[%s8] sm:$0x1]
  %v518 = vlaneseq
  %v519 = vshrl.u32 %v518, 7
  %v520 = vsub.s32 0, %v519
  %v521 = vrot.slane %v516, %v520
  %v523 = vadd.f32 %v514, %v521
  %v524 = vadd.f32 %v515, %v521
  %vm525 = vcmp.gt.f32.partialorder %v523, 0.0
  %vm526 = vcmp.gt.f32.partialorder %v524, 0.0
  %v527 = vmul.f32 %v523, 1.442695
  %v528 = vpow.pop %v527
  %v529 = vmul.f32 %v524, 1.442695
  %v530 = vpow.pop %v529
  %v531 = vsub.f32 %v528, 1.0
  %v532 = vsub.f32 %v530, 1.0
  %v533 = vsel %vm525, %v523, %v531
  %v534 = vsel %vm526, %v524, %v532
  %535 = vst.msk [vmem:[#allocation2] sm:$0x1] %vm331, 0.0
  %536 = vst.msk [vmem:[#allocation2 + $0x18] sm:$0x1] %vm331, 0.0
  %537 = vst.msk [vmem:[#allocation2 + $0x9] sm:$0x1] %vm331, 0.0
  %538 = vst.msk [vmem:[#allocation2 + $0x21] sm:$0x1] %vm331, 0.0
  %539 = vst.msk [vmem:[#allocation2 + $0x1] sm:$0xff] %vm180, %v533
  %540 = vst.msk [vmem:[#allocation2 + $0x19] sm:$0xff] %vm180, %v534
  %v541 = vld [vmem:[#allocation2] sm:$0xff]
  %v542 = vld [vmem:[#allocation2 + $0x18] sm:$0xff]
  %v543 = vld [vmem:[#allocation2 + $0x1] sm:$0xff]
  %v544 = vld [vmem:[#allocation2 + $0x19] sm:$0xff]
  %v545 = vld [vmem:[#allocation2 + $0x2] sm:$0xff]
  %v546 = vld [vmem:[#allocation2 + $0x1a] sm:$0xff]
  %549 = vrot.lane.b32.xlu0 %v543, 8
  %v550 = vpop.permute.xlu0 %549
  %551 = vrot.lane.b32.xlu0 %v544, 8
  %v552 = vpop.permute.xlu0 %551
  %557 = vrot.lane.b32.xlu0 %v545, 16
  %v558 = vpop.permute.xlu0 %557
  %559 = vrot.lane.b32.xlu0 %v546, 16
  %v560 = vpop.permute.xlu0 %559
  %v563 = vsel %vm180, %v541, %v550
  %v564 = vsel %vm180, %v542, %v552
  %v565 = vsel %vm388, %v563, %v558
  %v566 = vsel %vm388, %v564, %v560
  %v567 = vld [vmem:[%s9] sm:$0xff]
  %v568 = vld [vmem:[%s9 + $0x8] sm:$0xff]
  %v569 = vld [vmem:[%s9 + $0x10] sm:$0xff]
  %v571 = vsel %vm396, %v565, 0
  %v574 = vsel %vm396, %v566, 0
  %576 = vmatprep.subr.mxu0 0.0
  %577 = vmatpush1.msra.mxu0 0.0
  %578 = vmatprep.subr.mxu0 0.0
  %579 = vmatpush1.msra.mxu0 0.0
  %580 = vmatprep.subr.mxu0 0.0
  %581 = vmatpush1.msra.mxu0 0.0
  %582 = vmatprep.subr.mxu0 0.0
  %583 = vmatpush1.msra.mxu0 0.0
  %584 = vmatprep.subr.mxu0 0.0
  %585 = vmatpush1.msra.mxu0 0.0
  %586 = vmatprep.subr.mxu0 0.0
  %587 = vmatpush1.msra.mxu0 0.0
  %588 = vmatprep.subr.mxu0 0.0
  %589 = vmatpush1.msra.mxu0 0.0
  %590 = vmatprep.subr.mxu0 0.0
  %591 = vmatpush1.msra.mxu0 0.0
  %592 = vmatprep.subr.mxu0 0.0
  %593 = vmatpush1.msra.mxu0 0.0
  %594 = vmatprep.subr.mxu0 0.0
  %595 = vmatpush1.msra.mxu0 0.0
  %596 = vmatprep.subr.mxu0 0.0
  %597 = vmatpush1.msra.mxu0 0.0
  %598 = vmatprep.subr.mxu0 0.0
  %599 = vmatpush1.msra.mxu0 0.0
  %600 = vmatprep.subr.mxu0 0.0
  %601 = vmatpush1.msra.mxu0 0.0
  %602 = vmatprep.subr.mxu0 0.0
  %603 = vmatpush1.msra.mxu0 %v569
  %604 = vmatprep.subr.mxu0 0.0
  %605 = vmatpush1.msra.mxu0 %v568
  %606 = vmatprep.subr.mxu0 0.0
  %607 = vmatpush1.msra.mxu0 %v567
  %608 = vmatprep.subr.mxu0 0.0
  %609 = vmatpush2.msra.mxu0 0.0
  %610 = vmatprep.subr.mxu0 0.0
  %611 = vmatpush2.msra.mxu0 0.0
  %612 = vmatprep.subr.mxu0 0.0
  %613 = vmatpush2.msra.mxu0 0.0
  %614 = vmatprep.subr.mxu0 0.0
  %615 = vmatpush2.msra.mxu0 0.0
  %616 = vmatprep.subr.mxu0 0.0
  %617 = vmatpush2.msra.mxu0 0.0
  %618 = vmatprep.subr.mxu0 0.0
  %619 = vmatpush2.msra.mxu0 0.0
  %620 = vmatprep.subr.mxu0 0.0
  %621 = vmatpush2.msra.mxu0 0.0
  %622 = vmatprep.subr.mxu0 0.0
  %623 = vmatpush2.msra.mxu0 0.0
  %624 = vmatprep.subr.mxu0 0.0
  %625 = vmatpush2.msra.mxu0 0.0
  %626 = vmatprep.subr.mxu0 0.0
  %627 = vmatpush2.msra.mxu0 0.0
  %628 = vmatprep.subr.mxu0 0.0
  %629 = vmatpush2.msra.mxu0 0.0
  %630 = vmatprep.subr.mxu0 0.0
  %631 = vmatpush2.msra.mxu0 0.0
  %632 = vmatprep.subr.mxu0 0.0
  %633 = vmatpush2.msra.mxu0 0.0
  %634 = vmatprep.subr.mxu0 0.0
  %635 = vmatpush2.msra.mxu0 0.0
  %636 = vmatprep.subr.mxu0 0.0
  %637 = vmatpush2.msra.mxu0 0.0
  %638 = vmatprep.subr.mxu0 0.0
  %639 = vmatpush2.msra.mxu0 0.0
  %640 = vmatprep.mubr.f32.mxu0 0.0
  %641 = vmatmul.mubr.f32.gmra.mxu0 %v571
  %v642 = vpop.f32.mrf.mxu0
  %v643 = vadd.f32 0.0, %v642
  %v644 = vpop.f32.mrf.mxu0
  %645 = vmatprep.mubr.f32.mxu0 0.0
  %646 = vmatmul.mubr.f32.gmra.mxu0 %v574
  %v647 = vpop.f32.mrf.mxu0
  %v648 = vadd.f32 0.0, %v647
  %v649 = vpop.f32.mrf.mxu0
  %650 = vdwg.mxu0
  %v651 = vld [vmem:[%s10] sm:$0x1]
  %v653 = vlaneseq
  %v654 = vshrl.u32 %v653, 7
  %v655 = vsub.s32 0, %v654
  %v656 = vrot.slane %v651, %v655
  %v658 = vmul.f32 %v643, %v656
  %v659 = vmul.f32 %v648, %v656
  %v660 = vld [vmem:[%s11] sm:$0x1]
  %v662 = vlaneseq
  %v663 = vshrl.u32 %v662, 7
  %v664 = vsub.s32 0, %v663
  %v665 = vrot.slane %v660, %v664
  %v667 = vadd.f32 %v658, %v665
  %v668 = vadd.f32 %v659, %v665
  %vm669 = vcmp.gt.f32.partialorder %v667, 0.0
  %vm670 = vcmp.gt.f32.partialorder %v668, 0.0
  %v671 = vmul.f32 %v667, 1.442695
  %v672 = vpow.pop %v671
  %v673 = vmul.f32 %v668, 1.442695
  %v674 = vpow.pop %v673
  %v675 = vsub.f32 %v672, 1.0
  %v676 = vsub.f32 %v674, 1.0
  %v677 = vsel %vm669, %v667, %v675
  %v678 = vsel %vm670, %v668, %v676
  %vm679 = vcmask 122880
  %680 = vst.msk [vmem:[#allocation2] sm:$0x1] %vm679, 0.0
  %681 = vst.msk [vmem:[#allocation2 + $0x18] sm:$0x1] %vm679, 0.0
  %682 = vst.msk [vmem:[#allocation2 + $0x9] sm:$0x1] %vm679, 0.0
  %683 = vst.msk [vmem:[#allocation2 + $0x21] sm:$0x1] %vm679, 0.0
  %684 = vst.msk [vmem:[#allocation2 + $0x1] sm:$0xff] %vm388, %v677
  %685 = vst.msk [vmem:[#allocation2 + $0x19] sm:$0xff] %vm388, %v678
  %v686 = vld [vmem:[#allocation2] sm:$0xff]
  %v687 = vld [vmem:[#allocation2 + $0x18] sm:$0xff]
  %v688 = vld [vmem:[#allocation2 + $0x1] sm:$0xff]
  %v689 = vld [vmem:[#allocation2 + $0x19] sm:$0xff]
  %v690 = vld [vmem:[#allocation2 + $0x2] sm:$0xff]
  %v691 = vld [vmem:[#allocation2 + $0x1a] sm:$0xff]
  %694 = vrot.lane.b32.xlu0 %v688, 16
  %v695 = vpop.permute.xlu0 %694
  %696 = vrot.lane.b32.xlu0 %v689, 16
  %v697 = vpop.permute.xlu0 %696
  %702 = vrot.lane.b32.xlu0 %v690, 32
  %v703 = vpop.permute.xlu0 %702
  %704 = vrot.lane.b32.xlu0 %v691, 32
  %v705 = vpop.permute.xlu0 %704
  %v708 = vsel %vm388, %v686, %v695
  %v709 = vsel %vm388, %v687, %v697
  %vm710 = vcmask 261120
  %v711 = vsel %vm710, %v708, %v703
  %v712 = vsel %vm710, %v709, %v705
  %v713 = vld [vmem:[%s12] sm:$0xff]
  %v714 = vld [vmem:[%s12 + $0x8] sm:$0xff]
  %v715 = vld [vmem:[%s12 + $0x10] sm:$0xff]
  %v716 = vld [vmem:[%s12 + $0x18] sm:$0xff]
  %v717 = vld [vmem:[%s12 + $0x20] sm:$0xff]
  %v718 = vld [vmem:[%s12 + $0x28] sm:$0xff]
  %vm719 = vcmask 392192
  %v721 = vsel %vm719, %v711, 0
  %v724 = vsel %vm719, %v712, 0
  %726 = vmatprep.subr.mxu0 0.0
  %727 = vmatpush1.msra.mxu0 0.0
  %728 = vmatprep.subr.mxu0 0.0
  %729 = vmatpush1.msra.mxu0 0.0
  %730 = vmatprep.subr.mxu0 0.0
  %731 = vmatpush1.msra.mxu0 0.0
  %732 = vmatprep.subr.mxu0 0.0
  %733 = vmatpush1.msra.mxu0 0.0
  %734 = vmatprep.subr.mxu0 0.0
  %735 = vmatpush1.msra.mxu0 0.0
  %736 = vmatprep.subr.mxu0 0.0
  %737 = vmatpush1.msra.mxu0 0.0
  %738 = vmatprep.subr.mxu0 0.0
  %739 = vmatpush1.msra.mxu0 0.0
  %740 = vmatprep.subr.mxu0 0.0
  %741 = vmatpush1.msra.mxu0 0.0
  %742 = vmatprep.subr.mxu0 0.0
  %743 = vmatpush1.msra.mxu0 0.0
  %744 = vmatprep.subr.mxu0 0.0
  %745 = vmatpush1.msra.mxu0 0.0
  %746 = vmatprep.subr.mxu0 0.0
  %747 = vmatpush1.msra.mxu0 %v718
  %748 = vmatprep.subr.mxu0 0.0
  %749 = vmatpush1.msra.mxu0 %v717
  %750 = vmatprep.subr.mxu0 0.0
  %751 = vmatpush1.msra.mxu0 %v716
  %752 = vmatprep.subr.mxu0 0.0
  %753 = vmatpush1.msra.mxu0 %v715
  %754 = vmatprep.subr.mxu0 0.0
  %755 = vmatpush1.msra.mxu0 %v714
  %756 = vmatprep.subr.mxu0 0.0
  %757 = vmatpush1.msra.mxu0 %v713
  %758 = vmatprep.subr.mxu0 0.0
  %759 = vmatpush2.msra.mxu0 0.0
  %760 = vmatprep.subr.mxu0 0.0
  %761 = vmatpush2.msra.mxu0 0.0
  %762 = vmatprep.subr.mxu0 0.0
  %763 = vmatpush2.msra.mxu0 0.0
  %764 = vmatprep.subr.mxu0 0.0
  %765 = vmatpush2.msra.mxu0 0.0
  %766 = vmatprep.subr.mxu0 0.0
  %767 = vmatpush2.msra.mxu0 0.0
  %768 = vmatprep.subr.mxu0 0.0
  %769 = vmatpush2.msra.mxu0 0.0
  %770 = vmatprep.subr.mxu0 0.0
  %771 = vmatpush2.msra.mxu0 0.0
  %772 = vmatprep.subr.mxu0 0.0
  %773 = vmatpush2.msra.mxu0 0.0
  %774 = vmatprep.subr.mxu0 0.0
  %775 = vmatpush2.msra.mxu0 0.0
  %776 = vmatprep.subr.mxu0 0.0
  %777 = vmatpush2.msra.mxu0 0.0
  %778 = vmatprep.subr.mxu0 0.0
  %779 = vmatpush2.msra.mxu0 0.0
  %780 = vmatprep.subr.mxu0 0.0
  %781 = vmatpush2.msra.mxu0 0.0
  %782 = vmatprep.subr.mxu0 0.0
  %783 = vmatpush2.msra.mxu0 0.0
  %784 = vmatprep.subr.mxu0 0.0
  %785 = vmatpush2.msra.mxu0 0.0
  %786 = vmatprep.subr.mxu0 0.0
  %787 = vmatpush2.msra.mxu0 0.0
  %788 = vmatprep.subr.mxu0 0.0
  %789 = vmatpush2.msra.mxu0 0.0
  %790 = vmatprep.mubr.f32.mxu0 0.0
  %791 = vmatmul.mubr.f32.gmra.mxu0 %v721
  %v792 = vpop.f32.mrf.mxu0
  %v793 = vadd.f32 0.0, %v792
  %v794 = vpop.f32.mrf.mxu0
  %795 = vmatprep.mubr.f32.mxu0 0.0
  %796 = vmatmul.mubr.f32.gmra.mxu0 %v724
  %v797 = vpop.f32.mrf.mxu0
  %v798 = vadd.f32 0.0, %v797
  %v799 = vpop.f32.mrf.mxu0
  %800 = vdwg.mxu0
  %801 = vst.msk [vmem:[#allocation2] sm:$0xff] %vm388, %v793
  %802 = vst.msk [vmem:[#allocation2 + $0x18] sm:$0xff] %vm388, %v798
  %v803 = vld [vmem:[#allocation2] ss:$2 sm:$0xf]
  %v804 = vld [vmem:[%s499] ss:$2 sm:$0xf]
  %v805 = vld [vmem:[%s501] ss:$2 sm:$0xf]
  %v806 = vld [vmem:[%s503] ss:$2 sm:$0xf]
  %v807 = vmax.f32 %v803, %v805
  %v808 = vmax.f32 %v804, %v806
  %v809 = vld [vmem:[%s13] sm:$0x1]
  %v811 = vlaneseq
  %v812 = vshrl.u32 %v811, 7
  %v813 = vsub.s32 0, %v812
  %v814 = vrot.slane %v809, %v813
  %v816 = vmul.f32 %v807, %v814
  %v817 = vmul.f32 %v808, %v814
  %v818 = vld [vmem:[%s14] sm:$0x1]
  %v820 = vlaneseq
  %v821 = vshrl.u32 %v820, 7
  %v822 = vsub.s32 0, %v821
  %v823 = vrot.slane %v818, %v822
  %v825 = vadd.f32 %v816, %v823
  %v826 = vadd.f32 %v817, %v823
  %vm827 = vcmp.gt.f32.partialorder %v825, 0.0
  %vm828 = vcmp.gt.f32.partialorder %v826, 0.0
  %v829 = vmul.f32 %v825, 1.442695
  %v830 = vpow.pop %v829
  %v831 = vmul.f32 %v826, 1.442695
  %v832 = vpow.pop %v831
  %v833 = vsub.f32 %v830, 1.0
  %v834 = vsub.f32 %v832, 1.0
  %v835 = vsel %vm827, %v825, %v833
  %v836 = vsel %vm828, %v826, %v834
  %837 = vst.msk [vmem:[#allocation2] sm:$0x1] %vm679, 0.0
  %838 = vst.msk [vmem:[#allocation2 + $0x18] sm:$0x1] %vm679, 0.0
  %839 = vst.msk [vmem:[#allocation2 + $0x5] sm:$0x1] %vm679, 0.0
  %840 = vst.msk [vmem:[#allocation2 + $0x1d] sm:$0x1] %vm679, 0.0
  %vm841 = vcmask 125952
  %842 = vst.msk [vmem:[#allocation2 + $0x1] sm:$0xf] %vm841, %v835
  %843 = vst.msk [vmem:[#allocation2 + $0x19] sm:$0xf] %vm841, %v836
  %v844 = vld [vmem:[#allocation2] sm:$0xf]
  %v845 = vld [vmem:[#allocation2 + $0x18] sm:$0xf]
  %v846 = vld [vmem:[#allocation2 + $0x1] sm:$0xf]
  %v847 = vld [vmem:[#allocation2 + $0x19] sm:$0xf]
  %v848 = vld [vmem:[#allocation2 + $0x2] sm:$0xf]
  %v849 = vld [vmem:[#allocation2 + $0x1a] sm:$0xf]
  %852 = vrot.lane.b32.xlu0 %v846, 16
  %v853 = vpop.permute.xlu0 %852
  %854 = vrot.lane.b32.xlu0 %v847, 16
  %v855 = vpop.permute.xlu0 %854
  %860 = vrot.lane.b32.xlu0 %v848, 32
  %v861 = vpop.permute.xlu0 %860
  %862 = vrot.lane.b32.xlu0 %v849, 32
  %v863 = vpop.permute.xlu0 %862
  %v866 = vsel %vm388, %v844, %v853
  %v867 = vsel %vm388, %v845, %v855
  %v868 = vsel %vm710, %v866, %v861
  %v869 = vsel %vm710, %v867, %v863
  %v870 = vld [vmem:[%s15] sm:$0xff]
  %v871 = vld [vmem:[%s15 + $0x8] sm:$0xff]
  %v872 = vld [vmem:[%s15 + $0x10] sm:$0xff]
  %v873 = vld [vmem:[%s15 + $0x18] sm:$0xff]
  %v874 = vld [vmem:[%s15 + $0x20] sm:$0xff]
  %v875 = vld [vmem:[%s15 + $0x28] sm:$0xff]
  %v878 = vcombine.low %v868, %v869
  %v879 = vsel %vm719, %v878, 0
  %881 = vmatprep.subr.mxu0 0.0
  %882 = vmatpush1.msra.mxu0 0.0
  %883 = vmatprep.subr.mxu0 0.0
  %884 = vmatpush1.msra.mxu0 0.0
  %885 = vmatprep.subr.mxu0 0.0
  %886 = vmatpush1.msra.mxu0 0.0
  %887 = vmatprep.subr.mxu0 0.0
  %888 = vmatpush1.msra.mxu0 0.0
  %889 = vmatprep.subr.mxu0 0.0
  %890 = vmatpush1.msra.mxu0 0.0
  %891 = vmatprep.subr.mxu0 0.0
  %892 = vmatpush1.msra.mxu0 0.0
  %893 = vmatprep.subr.mxu0 0.0
  %894 = vmatpush1.msra.mxu0 0.0
  %895 = vmatprep.subr.mxu0 0.0
  %896 = vmatpush1.msra.mxu0 0.0
  %897 = vmatprep.subr.mxu0 0.0
  %898 = vmatpush1.msra.mxu0 0.0
  %899 = vmatprep.subr.mxu0 0.0
  %900 = vmatpush1.msra.mxu0 0.0
  %901 = vmatprep.subr.mxu0 0.0
  %902 = vmatpush1.msra.mxu0 %v875
  %903 = vmatprep.subr.mxu0 0.0
  %904 = vmatpush1.msra.mxu0 %v874
  %905 = vmatprep.subr.mxu0 0.0
  %906 = vmatpush1.msra.mxu0 %v873
  %907 = vmatprep.subr.mxu0 0.0
  %908 = vmatpush1.msra.mxu0 %v872
  %909 = vmatprep.subr.mxu0 0.0
  %910 = vmatpush1.msra.mxu0 %v871
  %911 = vmatprep.subr.mxu0 0.0
  %912 = vmatpush1.msra.mxu0 %v870
  %913 = vmatprep.subr.mxu0 0.0
  %914 = vmatpush2.msra.mxu0 0.0
  %915 = vmatprep.subr.mxu0 0.0
  %916 = vmatpush2.msra.mxu0 0.0
  %917 = vmatprep.subr.mxu0 0.0
  %918 = vmatpush2.msra.mxu0 0.0
  %919 = vmatprep.subr.mxu0 0.0
  %920 = vmatpush2.msra.mxu0 0.0
  %921 = vmatprep.subr.mxu0 0.0
  %922 = vmatpush2.msra.mxu0 0.0
  %923 = vmatprep.subr.mxu0 0.0
  %924 = vmatpush2.msra.mxu0 0.0
  %925 = vmatprep.subr.mxu0 0.0
  %926 = vmatpush2.msra.mxu0 0.0
  %927 = vmatprep.subr.mxu0 0.0
  %928 = vmatpush2.msra.mxu0 0.0
  %929 = vmatprep.subr.mxu0 0.0
  %930 = vmatpush2.msra.mxu0 0.0
  %931 = vmatprep.subr.mxu0 0.0
  %932 = vmatpush2.msra.mxu0 0.0
  %933 = vmatprep.subr.mxu0 0.0
  %934 = vmatpush2.msra.mxu0 0.0
  %935 = vmatprep.subr.mxu0 0.0
  %936 = vmatpush2.msra.mxu0 0.0
  %937 = vmatprep.subr.mxu0 0.0
  %938 = vmatpush2.msra.mxu0 0.0
  %939 = vmatprep.subr.mxu0 0.0
  %940 = vmatpush2.msra.mxu0 0.0
  %941 = vmatprep.subr.mxu0 0.0
  %942 = vmatpush2.msra.mxu0 0.0
  %943 = vmatprep.subr.mxu0 0.0
  %944 = vmatpush2.msra.mxu0 0.0
  %945 = vmatprep.mubr.f32.mxu0 0.0
  %946 = vmatmul.mubr.f32.gmra.mxu0 %v879
  %v947 = vpop.f32.mrf.mxu0
  %v948 = vadd.f32 0.0, %v947
  %v949 = vpop.f32.mrf.mxu0
  %950 = vdwg.mxu0
  %v952 = vcombine.high %v948, %v948
  %v954 = vld [vmem:[%s16] sm:$0x1]
  %v956 = vlaneseq
  %v957 = vshrl.u32 %v956, 7
  %v958 = vsub.s32 0, %v957
  %v959 = vrot.slane %v954, %v958
  %v961 = vmul.f32 %v948, %v959
  %v962 = vmul.f32 %v952, %v959
  %v963 = vld [vmem:[%s17] sm:$0x1]
  %v965 = vlaneseq
  %v966 = vshrl.u32 %v965, 7
  %v967 = vsub.s32 0, %v966
  %v968 = vrot.slane %v963, %v967
  %v970 = vadd.f32 %v961, %v968
  %v971 = vadd.f32 %v962, %v968
  %vm972 = vcmp.gt.f32.partialorder %v970, 0.0
  %vm973 = vcmp.gt.f32.partialorder %v971, 0.0
  %v974 = vmul.f32 %v970, 1.442695
  %v975 = vpow.pop %v974
  %v976 = vmul.f32 %v971, 1.442695
  %v977 = vpow.pop %v976
  %v978 = vsub.f32 %v975, 1.0
  %v979 = vsub.f32 %v977, 1.0
  %v980 = vsel %vm972, %v970, %v978
  %v981 = vsel %vm973, %v971, %v979
  %vm982 = vcmask 253952
  %983 = vst.msk [vmem:[#allocation2] sm:$0x1] %vm982, 0.0
  %984 = vst.msk [vmem:[#allocation2 + $0x18] sm:$0x1] %vm982, 0.0
  %985 = vst.msk [vmem:[#allocation2 + $0x5] sm:$0x1] %vm982, 0.0
  %986 = vst.msk [vmem:[#allocation2 + $0x1d] sm:$0x1] %vm982, 0.0
  %vm987 = vcmask 257024
  %988 = vst.msk [vmem:[#allocation2 + $0x1] sm:$0xf] %vm987, %v980
  %989 = vst.msk [vmem:[#allocation2 + $0x19] sm:$0xf] %vm987, %v981
  %v990 = vld [vmem:[#allocation2] sm:$0xf]
  %v991 = vld [vmem:[#allocation2 + $0x18] sm:$0xf]
  %v992 = vld [vmem:[#allocation2 + $0x1] sm:$0xf]
  %v993 = vld [vmem:[#allocation2 + $0x19] sm:$0xf]
  %v994 = vld [vmem:[#allocation2 + $0x2] sm:$0xf]
  %v995 = vld [vmem:[#allocation2 + $0x1a] sm:$0xf]
  %998 = vrot.lane.b32.xlu0 %v992, 32
  %v999 = vpop.permute.xlu0 %998
  %1000 = vrot.lane.b32.xlu0 %v993, 32
  %v1001 = vpop.permute.xlu0 %1000
  %1006 = vrot.lane.b32.xlu0 %v994, 64
  %v1007 = vpop.permute.xlu0 %1006
  %1008 = vrot.lane.b32.xlu0 %v995, 64
  %v1009 = vpop.permute.xlu0 %1008
  %v1012 = vsel %vm710, %v990, %v999
  %v1013 = vsel %vm710, %v991, %v1001
  %vm1014 = vcmask 523264
  %v1015 = vsel %vm1014, %v1012, %v1007
  %v1016 = vsel %vm1014, %v1013, %v1009
  %v1017 = vld [vmem:[%s18] sm:$0xff]
  %v1018 = vld [vmem:[%s18 + $0x8] sm:$0xff]
  %v1019 = vld [vmem:[%s18 + $0x10] sm:$0xff]
  %v1020 = vld [vmem:[%s18 + $0x18] sm:$0xff]
  %v1021 = vld [vmem:[%s18 + $0x20] sm:$0xff]
  %v1022 = vld [vmem:[%s18 + $0x28] sm:$0xff]
  %v1023 = vld [vmem:[%s18 + $0x30] sm:$0xff]
  %v1024 = vld [vmem:[%s18 + $0x38] sm:$0xff]
  %v1025 = vld [vmem:[%s18 + $0x40] sm:$0xff]
  %v1026 = vld [vmem:[%s18 + $0x48] sm:$0xff]
  %v1027 = vld [vmem:[%s18 + $0x50] sm:$0xff]
  %v1028 = vld [vmem:[%s18 + $0x58] sm:$0xff]
  %v1031 = vcombine.low %v1015, %v1016
  %vm1032 = vcmask 785408
  %v1033 = vsel %vm1032, %v1031, 0
  %1035 = vmatprep.subr.mxu0 0.0
  %1036 = vmatpush1.msra.mxu0 0.0
  %1037 = vmatprep.subr.mxu0 0.0
  %1038 = vmatpush1.msra.mxu0 0.0
  %1039 = vmatprep.subr.mxu0 0.0
  %1040 = vmatpush1.msra.mxu0 0.0
  %1041 = vmatprep.subr.mxu0 0.0
  %1042 = vmatpush1.msra.mxu0 0.0
  %1043 = vmatprep.subr.mxu0 0.0
  %1044 = vmatpush1.msra.mxu0 %v1028
  %1045 = vmatprep.subr.mxu0 0.0
  %1046 = vmatpush1.msra.mxu0 %v1027
  %1047 = vmatprep.subr.mxu0 0.0
  %1048 = vmatpush1.msra.mxu0 %v1026
  %1049 = vmatprep.subr.mxu0 0.0
  %1050 = vmatpush1.msra.mxu0 %v1025
  %1051 = vmatprep.subr.mxu0 0.0
  %1052 = vmatpush1.msra.mxu0 %v1024
  %1053 = vmatprep.subr.mxu0 0.0
  %1054 = vmatpush1.msra.mxu0 %v1023
  %1055 = vmatprep.subr.mxu0 0.0
  %1056 = vmatpush1.msra.mxu0 %v1022
  %1057 = vmatprep.subr.mxu0 0.0
  %1058 = vmatpush1.msra.mxu0 %v1021
  %1059 = vmatprep.subr.mxu0 0.0
  %1060 = vmatpush1.msra.mxu0 %v1020
  %1061 = vmatprep.subr.mxu0 0.0
  %1062 = vmatpush1.msra.mxu0 %v1019
  %1063 = vmatprep.subr.mxu0 0.0
  %1064 = vmatpush1.msra.mxu0 %v1018
  %1065 = vmatprep.subr.mxu0 0.0
  %1066 = vmatpush1.msra.mxu0 %v1017
  %1067 = vmatprep.subr.mxu0 0.0
  %1068 = vmatpush2.msra.mxu0 0.0
  %1069 = vmatprep.subr.mxu0 0.0
  %1070 = vmatpush2.msra.mxu0 0.0
  %1071 = vmatprep.subr.mxu0 0.0
  %1072 = vmatpush2.msra.mxu0 0.0
  %1073 = vmatprep.subr.mxu0 0.0
  %1074 = vmatpush2.msra.mxu0 0.0
  %1075 = vmatprep.subr.mxu0 0.0
  %1076 = vmatpush2.msra.mxu0 0.0
  %1077 = vmatprep.subr.mxu0 0.0
  %1078 = vmatpush2.msra.mxu0 0.0
  %1079 = vmatprep.subr.mxu0 0.0
  %1080 = vmatpush2.msra.mxu0 0.0
  %1081 = vmatprep.subr.mxu0 0.0
  %1082 = vmatpush2.msra.mxu0 0.0
  %1083 = vmatprep.subr.mxu0 0.0
  %1084 = vmatpush2.msra.mxu0 0.0
  %1085 = vmatprep.subr.mxu0 0.0
  %1086 = vmatpush2.msra.mxu0 0.0
  %1087 = vmatprep.subr.mxu0 0.0
  %1088 = vmatpush2.msra.mxu0 0.0
  %1089 = vmatprep.subr.mxu0 0.0
  %1090 = vmatpush2.msra.mxu0 0.0
  %1091 = vmatprep.subr.mxu0 0.0
  %1092 = vmatpush2.msra.mxu0 0.0
  %1093 = vmatprep.subr.mxu0 0.0
  %1094 = vmatpush2.msra.mxu0 0.0
  %1095 = vmatprep.subr.mxu0 0.0
  %1096 = vmatpush2.msra.mxu0 0.0
  %1097 = vmatprep.subr.mxu0 0.0
  %1098 = vmatpush2.msra.mxu0 0.0
  %1099 = vmatprep.mubr.f32.mxu0 0.0
  %1100 = vmatmul.mubr.f32.gmra.mxu0 %v1033
  %v1101 = vpop.f32.mrf.mxu0
  %v1102 = vadd.f32 0.0, %v1101
  %v1103 = vpop.f32.mrf.mxu0
  %1104 = vdwg.mxu0
  %v1106 = vcombine.high %v1102, %v1102
  %1108 = vst.msk [vmem:[#allocation2] sm:$0xf] %vm987, %v1102
  %1109 = vst.msk [vmem:[#allocation2 + $0x18] sm:$0xf] %vm987, %v1106
  %v1110 = vld [vmem:[#allocation2] ss:$2 sm:$0x3]
  %v1111 = vld [vmem:[%s499] ss:$2 sm:$0x3]
  %v1112 = vld [vmem:[%s501] ss:$2 sm:$0x3]
  %v1113 = vld [vmem:[%s503] ss:$2 sm:$0x3]
  %v1114 = vmax.f32 %v1110, %v1112
  %v1115 = vmax.f32 %v1111, %v1113
  %v1118 = vrot.slane %v1115, 7
  %vm1119 = vcmask 1041409
  %v1120 = vsel %vm1119, %v1118, %v1114
  %v1122 = vrot.slane %v1114, 1
  %v1123 = vsel %vm1119, %v1115, %v1122
  %1124 = vrot.lane.b32.xlu0 %v1123, 32
  %v1125 = vpop.permute.xlu0 %1124
  %v1127 = vsel %vm710, %v1120, %v1125
  %v1128 = vld [vmem:[%s19] sm:$0xff]
  %v1129 = vld [vmem:[%s19 + $0x8] sm:$0xff]
  %v1130 = vld [vmem:[%s19 + $0x10] sm:$0xff]
  %v1131 = vld [vmem:[%s19 + $0x18] sm:$0xff]
  %v1132 = vld [vmem:[%s19 + $0x20] sm:$0xff]
  %v1133 = vld [vmem:[%s19 + $0x28] sm:$0xff]
  %v1134 = vld [vmem:[%s19 + $0x30] sm:$0xff]
  %v1135 = vld [vmem:[%s19 + $0x38] sm:$0xff]
  %v1136 = vld [vmem:[%s19 + $0x40] sm:$0xff]
  %v1137 = vld [vmem:[%s19 + $0x48] sm:$0xff]
  %v1138 = vld [vmem:[%s19 + $0x50] sm:$0xff]
  %v1139 = vld [vmem:[%s19 + $0x58] sm:$0xff]
  %v1140 = vld [vmem:[%s19 + $0x60] sm:$0xff]
  %v1141 = vld [vmem:[%s19 + $0x68] sm:$0xff]
  %v1142 = vld [vmem:[%s19 + $0x70] sm:$0xff]
  %v1143 = vld [vmem:[%s19 + $0x78] sm:$0xff]
  %v1144 = vld [vmem:[%s19 + $0x80] sm:$0xff]
  %v1145 = vld [vmem:[%s19 + $0x88] sm:$0xff]
  %v1146 = vld [vmem:[%s19 + $0x90] sm:$0xff]
  %v1147 = vld [vmem:[%s19 + $0x98] sm:$0xff]
  %v1148 = vld [vmem:[%s19 + $0xa0] sm:$0xff]
  %v1149 = vld [vmem:[%s19 + $0xa8] sm:$0xff]
  %v1150 = vld [vmem:[%s19 + $0xb0] sm:$0xff]
  %v1151 = vld [vmem:[%s19 + $0xb8] sm:$0xff]
  %v1152 = vld [vmem:[%s19 + $0xc0] sm:$0xff]
  %v1153 = vld [vmem:[%s19 + $0xc8] sm:$0xff]
  %v1154 = vld [vmem:[%s19 + $0xd0] sm:$0xff]
  %v1155 = vld [vmem:[%s19 + $0xd8] sm:$0xff]
  %v1156 = vld [vmem:[%s19 + $0xe0] sm:$0xff]
  %v1157 = vld [vmem:[%s19 + $0xe8] sm:$0xff]
  %v1158 = vld [vmem:[%s19 + $0xf0] sm:$0xff]
  %v1159 = vld [vmem:[%s19 + $0xf8] sm:$0xff]
  %v1160 = vld [vmem:[%s19 + $0x100] sm:$0xff]
  %v1161 = vld [vmem:[%s19 + $0x108] sm:$0xff]
  %v1162 = vld [vmem:[%s19 + $0x110] sm:$0xff]
  %v1163 = vld [vmem:[%s19 + $0x118] sm:$0xff]
  %v1164 = vld [vmem:[%s19 + $0x120] sm:$0xff]
  %v1165 = vld [vmem:[%s19 + $0x128] sm:$0xff]
  %v1166 = vld [vmem:[%s19 + $0x130] sm:$0xff]
  %v1167 = vld [vmem:[%s19 + $0x138] sm:$0xff]
  %v1168 = vld [vmem:[%s19 + $0x140] sm:$0xff]
  %v1169 = vld [vmem:[%s19 + $0x148] sm:$0xff]
  %v1170 = vld [vmem:[%s19 + $0x150] sm:$0xff]
  %v1171 = vld [vmem:[%s19 + $0x158] sm:$0xff]
  %v1172 = vld [vmem:[%s19 + $0x160] sm:$0xff]
  %v1173 = vld [vmem:[%s19 + $0x168] sm:$0xff]
  %v1174 = vld [vmem:[%s19 + $0x170] sm:$0xff]
  %v1175 = vld [vmem:[%s19 + $0x178] sm:$0xff]
  %v1176 = vld [vmem:[%s19 + $0x180] sm:$0xff]
  %v1177 = vld [vmem:[%s19 + $0x188] sm:$0xff]
  %v1178 = vld [vmem:[%s19 + $0x190] sm:$0xff]
  %v1179 = vld [vmem:[%s19 + $0x198] sm:$0xff]
  %v1180 = vld [vmem:[%s19 + $0x1a0] sm:$0xff]
  %v1181 = vld [vmem:[%s19 + $0x1a8] sm:$0xff]
  %v1182 = vld [vmem:[%s19 + $0x1b0] sm:$0xff]
  %v1183 = vld [vmem:[%s19 + $0x1b8] sm:$0xff]
  %v1184 = vld [vmem:[%s19 + $0x1c0] sm:$0xff]
  %v1185 = vld [vmem:[%s19 + $0x1c8] sm:$0xff]
  %v1186 = vld [vmem:[%s19 + $0x1d0] sm:$0xff]
  %v1187 = vld [vmem:[%s19 + $0x1d8] sm:$0xff]
  %v1188 = vld [vmem:[%s19 + $0x1e0] sm:$0xff]
  %v1189 = vld [vmem:[%s19 + $0x1e8] sm:$0xff]
  %v1190 = vld [vmem:[%s19 + $0x1f0] sm:$0xff]
  %v1191 = vld [vmem:[%s19 + $0x1f8] sm:$0xff]
  %v1192 = vld [vmem:[%s20] sm:$0xff]
  %v1194 = vlaneseq
  %v1195 = vshrl.u32 %v1194, 7
  %v1196 = vsub.s32 0, %v1195
  %v1197 = vrot.slane %v1192, %v1196
  %v1198 = vlaneseq
  %v1199 = vshrl.u32 %v1198, 7
  %v1200 = vsub.s32 1, %v1199
  %v1201 = vrot.slane %v1192, %v1200
  %v1202 = vlaneseq
  %v1203 = vshrl.u32 %v1202, 7
  %v1204 = vsub.s32 2, %v1203
  %v1205 = vrot.slane %v1192, %v1204
  %v1206 = vlaneseq
  %v1207 = vshrl.u32 %v1206, 7
  %v1208 = vsub.s32 3, %v1207
  %v1209 = vrot.slane %v1192, %v1208
  %v1210 = vlaneseq
  %v1211 = vshrl.u32 %v1210, 7
  %v1212 = vsub.s32 4, %v1211
  %v1213 = vrot.slane %v1192, %v1212
  %v1214 = vlaneseq
  %v1215 = vshrl.u32 %v1214, 7
  %v1216 = vsub.s32 5, %v1215
  %v1217 = vrot.slane %v1192, %v1216
  %v1218 = vlaneseq
  %v1219 = vshrl.u32 %v1218, 7
  %v1220 = vsub.s32 6, %v1219
  %v1221 = vrot.slane %v1192, %v1220
  %v1222 = vlaneseq
  %v1223 = vshrl.u32 %v1222, 7
  %v1224 = vsub.s32 7, %v1223
  %v1225 = vrot.slane %v1192, %v1224
  %v1235 = vsel %vm1014, %v1127, 0
  %1237 = vmatprep.subr.mxu0 0.0
  %1238 = vmatpush1.msra.mxu0 0.0
  %1239 = vmatprep.subr.mxu0 0.0
  %1240 = vmatpush1.msra.mxu0 0.0
  %1241 = vmatprep.subr.mxu0 0.0
  %1242 = vmatpush1.msra.mxu0 0.0
  %1243 = vmatprep.subr.mxu0 0.0
  %1244 = vmatpush1.msra.mxu0 0.0
  %1245 = vmatprep.subr.mxu0 0.0
  %1246 = vmatpush1.msra.mxu0 0.0
  %1247 = vmatprep.subr.mxu0 0.0
  %1248 = vmatpush1.msra.mxu0 0.0
  %1249 = vmatprep.subr.mxu0 0.0
  %1250 = vmatpush1.msra.mxu0 0.0
  %1251 = vmatprep.subr.mxu0 0.0
  %1252 = vmatpush1.msra.mxu0 0.0
  %1253 = vmatprep.subr.mxu0 %v1185
  %1254 = vmatpush1.msra.mxu0 %v1184
  %1255 = vmatprep.subr.mxu0 %v1177
  %1256 = vmatpush1.msra.mxu0 %v1176
  %1257 = vmatprep.subr.mxu0 %v1169
  %1258 = vmatpush1.msra.mxu0 %v1168
  %1259 = vmatprep.subr.mxu0 %v1161
  %1260 = vmatpush1.msra.mxu0 %v1160
  %1261 = vmatprep.subr.mxu0 %v1153
  %1262 = vmatpush1.msra.mxu0 %v1152
  %1263 = vmatprep.subr.mxu0 %v1145
  %1264 = vmatpush1.msra.mxu0 %v1144
  %1265 = vmatprep.subr.mxu0 %v1137
  %1266 = vmatpush1.msra.mxu0 %v1136
  %1267 = vmatprep.subr.mxu0 %v1129
  %1268 = vmatpush1.msra.mxu0 %v1128
  %1269 = vmatprep.subr.mxu0 0.0
  %1270 = vmatpush2.msra.mxu0 0.0
  %1271 = vmatprep.subr.mxu0 0.0
  %1272 = vmatpush2.msra.mxu0 0.0
  %1273 = vmatprep.subr.mxu0 0.0
  %1274 = vmatpush2.msra.mxu0 0.0
  %1275 = vmatprep.subr.mxu0 0.0
  %1276 = vmatpush2.msra.mxu0 0.0
  %1277 = vmatprep.subr.mxu0 0.0
  %1278 = vmatpush2.msra.mxu0 0.0
  %1279 = vmatprep.subr.mxu0 0.0
  %1280 = vmatpush2.msra.mxu0 0.0
  %1281 = vmatprep.subr.mxu0 0.0
  %1282 = vmatpush2.msra.mxu0 0.0
  %1283 = vmatprep.subr.mxu0 0.0
  %1284 = vmatpush2.msra.mxu0 0.0
  %1285 = vmatprep.subr.mxu0 0.0
  %1286 = vmatpush2.msra.mxu0 0.0
  %1287 = vmatprep.subr.mxu0 0.0
  %1288 = vmatpush2.msra.mxu0 0.0
  %1289 = vmatprep.subr.mxu0 0.0
  %1290 = vmatpush2.msra.mxu0 0.0
  %1291 = vmatprep.subr.mxu0 0.0
  %1292 = vmatpush2.msra.mxu0 0.0
  %1293 = vmatprep.subr.mxu0 0.0
  %1294 = vmatpush2.msra.mxu0 0.0
  %1295 = vmatprep.subr.mxu0 0.0
  %1296 = vmatpush2.msra.mxu0 0.0
  %1297 = vmatprep.subr.mxu0 0.0
  %1298 = vmatpush2.msra.mxu0 0.0
  %1299 = vmatprep.subr.mxu0 0.0
  %1300 = vmatpush2.msra.mxu0 0.0
  %1301 = vmatprep.mubr.f32.mxu0 0.0
  %1302 = vmatmul.mubr.f32.gmra.mxu0 %v1235
  %v1303 = vpop.f32.mrf.mxu0
  %v1304 = vadd.f32 %v1197, %v1303
  %v1305 = vpop.f32.mrf.mxu0
  %v1306 = vadd.f32 %v1201, %v1305
  %1307 = vdwg.mxu0
  %1308 = vmatprep.subr.mxu0 0.0
  %1309 = vmatpush1.msra.mxu0 0.0
  %1310 = vmatprep.subr.mxu0 0.0
  %1311 = vmatpush1.msra.mxu0 0.0
  %1312 = vmatprep.subr.mxu0 0.0
  %1313 = vmatpush1.msra.mxu0 0.0
  %1314 = vmatprep.subr.mxu0 0.0
  %1315 = vmatpush1.msra.mxu0 0.0
  %1316 = vmatprep.subr.mxu0 0.0
  %1317 = vmatpush1.msra.mxu0 0.0
  %1318 = vmatprep.subr.mxu0 0.0
  %1319 = vmatpush1.msra.mxu0 0.0
  %1320 = vmatprep.subr.mxu0 0.0
  %1321 = vmatpush1.msra.mxu0 0.0
  %1322 = vmatprep.subr.mxu0 0.0
  %1323 = vmatpush1.msra.mxu0 0.0
  %1324 = vmatprep.subr.mxu0 %v1187
  %1325 = vmatpush1.msra.mxu0 %v1186
  %1326 = vmatprep.subr.mxu0 %v1179
  %1327 = vmatpush1.msra.mxu0 %v1178
  %1328 = vmatprep.subr.mxu0 %v1171
  %1329 = vmatpush1.msra.mxu0 %v1170
  %1330 = vmatprep.subr.mxu0 %v1163
  %1331 = vmatpush1.msra.mxu0 %v1162
  %1332 = vmatprep.subr.mxu0 %v1155
  %1333 = vmatpush1.msra.mxu0 %v1154
  %1334 = vmatprep.subr.mxu0 %v1147
  %1335 = vmatpush1.msra.mxu0 %v1146
  %1336 = vmatprep.subr.mxu0 %v1139
  %1337 = vmatpush1.msra.mxu0 %v1138
  %1338 = vmatprep.subr.mxu0 %v1131
  %1339 = vmatpush1.msra.mxu0 %v1130
  %1340 = vmatprep.subr.mxu0 0.0
  %1341 = vmatpush2.msra.mxu0 0.0
  %1342 = vmatprep.subr.mxu0 0.0
  %1343 = vmatpush2.msra.mxu0 0.0
  %1344 = vmatprep.subr.mxu0 0.0
  %1345 = vmatpush2.msra.mxu0 0.0
  %1346 = vmatprep.subr.mxu0 0.0
  %1347 = vmatpush2.msra.mxu0 0.0
  %1348 = vmatprep.subr.mxu0 0.0
  %1349 = vmatpush2.msra.mxu0 0.0
  %1350 = vmatprep.subr.mxu0 0.0
  %1351 = vmatpush2.msra.mxu0 0.0
  %1352 = vmatprep.subr.mxu0 0.0
  %1353 = vmatpush2.msra.mxu0 0.0
  %1354 = vmatprep.subr.mxu0 0.0
  %1355 = vmatpush2.msra.mxu0 0.0
  %1356 = vmatprep.subr.mxu0 0.0
  %1357 = vmatpush2.msra.mxu0 0.0
  %1358 = vmatprep.subr.mxu0 0.0
  %1359 = vmatpush2.msra.mxu0 0.0
  %1360 = vmatprep.subr.mxu0 0.0
  %1361 = vmatpush2.msra.mxu0 0.0
  %1362 = vmatprep.subr.mxu0 0.0
  %1363 = vmatpush2.msra.mxu0 0.0
  %1364 = vmatprep.subr.mxu0 0.0
  %1365 = vmatpush2.msra.mxu0 0.0
  %1366 = vmatprep.subr.mxu0 0.0
  %1367 = vmatpush2.msra.mxu0 0.0
  %1368 = vmatprep.subr.mxu0 0.0
  %1369 = vmatpush2.msra.mxu0 0.0
  %1370 = vmatprep.subr.mxu0 0.0
  %1371 = vmatpush2.msra.mxu0 0.0
  %1372 = vmatprep.mubr.f32.mxu0 0.0
  %1373 = vmatmul.mubr.f32.gmra.mxu0 %v1235
  %v1374 = vpop.f32.mrf.mxu0
  %v1375 = vadd.f32 %v1205, %v1374
  %v1376 = vpop.f32.mrf.mxu0
  %v1377 = vadd.f32 %v1209, %v1376
  %1378 = vdwg.mxu0
  %1379 = vmatprep.subr.mxu0 0.0
  %1380 = vmatpush1.msra.mxu0 0.0
  %1381 = vmatprep.subr.mxu0 0.0
  %1382 = vmatpush1.msra.mxu0 0.0
  %1383 = vmatprep.subr.mxu0 0.0
  %1384 = vmatpush1.msra.mxu0 0.0
  %1385 = vmatprep.subr.mxu0 0.0
  %1386 = vmatpush1.msra.mxu0 0.0
  %1387 = vmatprep.subr.mxu0 0.0
  %1388 = vmatpush1.msra.mxu0 0.0
  %1389 = vmatprep.subr.mxu0 0.0
  %1390 = vmatpush1.msra.mxu0 0.0
  %1391 = vmatprep.subr.mxu0 0.0
  %1392 = vmatpush1.msra.mxu0 0.0
  %1393 = vmatprep.subr.mxu0 0.0
  %1394 = vmatpush1.msra.mxu0 0.0
  %1395 = vmatprep.subr.mxu0 %v1189
  %1396 = vmatpush1.msra.mxu0 %v1188
  %1397 = vmatprep.subr.mxu0 %v1181
  %1398 = vmatpush1.msra.mxu0 %v1180
  %1399 = vmatprep.subr.mxu0 %v1173
  %1400 = vmatpush1.msra.mxu0 %v1172
  %1401 = vmatprep.subr.mxu0 %v1165
  %1402 = vmatpush1.msra.mxu0 %v1164
  %1403 = vmatprep.subr.mxu0 %v1157
  %1404 = vmatpush1.msra.mxu0 %v1156
  %1405 = vmatprep.subr.mxu0 %v1149
  %1406 = vmatpush1.msra.mxu0 %v1148
  %1407 = vmatprep.subr.mxu0 %v1141
  %1408 = vmatpush1.msra.mxu0 %v1140
  %1409 = vmatprep.subr.mxu0 %v1133
  %1410 = vmatpush1.msra.mxu0 %v1132
  %1411 = vmatprep.subr.mxu0 0.0
  %1412 = vmatpush2.msra.mxu0 0.0
  %1413 = vmatprep.subr.mxu0 0.0
  %1414 = vmatpush2.msra.mxu0 0.0
  %1415 = vmatprep.subr.mxu0 0.0
  %1416 = vmatpush2.msra.mxu0 0.0
  %1417 = vmatprep.subr.mxu0 0.0
  %1418 = vmatpush2.msra.mxu0 0.0
  %1419 = vmatprep.subr.mxu0 0.0
  %1420 = vmatpush2.msra.mxu0 0.0
  %1421 = vmatprep.subr.mxu0 0.0
  %1422 = vmatpush2.msra.mxu0 0.0
  %1423 = vmatprep.subr.mxu0 0.0
  %1424 = vmatpush2.msra.mxu0 0.0
  %1425 = vmatprep.subr.mxu0 0.0
  %1426 = vmatpush2.msra.mxu0 0.0
  %1427 = vmatprep.subr.mxu0 0.0
  %1428 = vmatpush2.msra.mxu0 0.0
  %1429 = vmatprep.subr.mxu0 0.0
  %1430 = vmatpush2.msra.mxu0 0.0
  %1431 = vmatprep.subr.mxu0 0.0
  %1432 = vmatpush2.msra.mxu0 0.0
  %1433 = vmatprep.subr.mxu0 0.0
  %1434 = vmatpush2.msra.mxu0 0.0
  %1435 = vmatprep.subr.mxu0 0.0
  %1436 = vmatpush2.msra.mxu0 0.0
  %1437 = vmatprep.subr.mxu0 0.0
  %1438 = vmatpush2.msra.mxu0 0.0
  %1439 = vmatprep.subr.mxu0 0.0
  %1440 = vmatpush2.msra.mxu0 0.0
  %1441 = vmatprep.subr.mxu0 0.0
  %1442 = vmatpush2.msra.mxu0 0.0
  %1443 = vmatprep.mubr.f32.mxu0 0.0
  %1444 = vmatmul.mubr.f32.gmra.mxu0 %v1235
  %v1445 = vpop.f32.mrf.mxu0
  %v1446 = vadd.f32 %v1213, %v1445
  %v1447 = vpop.f32.mrf.mxu0
  %v1448 = vadd.f32 %v1217, %v1447
  %1449 = vdwg.mxu0
  %1450 = vmatprep.subr.mxu0 0.0
  %1451 = vmatpush1.msra.mxu0 0.0
  %1452 = vmatprep.subr.mxu0 0.0
  %1453 = vmatpush1.msra.mxu0 0.0
  %1454 = vmatprep.subr.mxu0 0.0
  %1455 = vmatpush1.msra.mxu0 0.0
  %1456 = vmatprep.subr.mxu0 0.0
  %1457 = vmatpush1.msra.mxu0 0.0
  %1458 = vmatprep.subr.mxu0 0.0
  %1459 = vmatpush1.msra.mxu0 0.0
  %1460 = vmatprep.subr.mxu0 0.0
  %1461 = vmatpush1.msra.mxu0 0.0
  %1462 = vmatprep.subr.mxu0 0.0
  %1463 = vmatpush1.msra.mxu0 0.0
  %1464 = vmatprep.subr.mxu0 0.0
  %1465 = vmatpush1.msra.mxu0 0.0
  %1466 = vmatprep.subr.mxu0 %v1191
  %1467 = vmatpush1.msra.mxu0 %v1190
  %1468 = vmatprep.subr.mxu0 %v1183
  %1469 = vmatpush1.msra.mxu0 %v1182
  %1470 = vmatprep.subr.mxu0 %v1175
  %1471 = vmatpush1.msra.mxu0 %v1174
  %1472 = vmatprep.subr.mxu0 %v1167
  %1473 = vmatpush1.msra.mxu0 %v1166
  %1474 = vmatprep.subr.mxu0 %v1159
  %1475 = vmatpush1.msra.mxu0 %v1158
  %1476 = vmatprep.subr.mxu0 %v1151
  %1477 = vmatpush1.msra.mxu0 %v1150
  %1478 = vmatprep.subr.mxu0 %v1143
  %1479 = vmatpush1.msra.mxu0 %v1142
  %1480 = vmatprep.subr.mxu0 %v1135
  %1481 = vmatpush1.msra.mxu0 %v1134
  %1482 = vmatprep.subr.mxu0 0.0
  %1483 = vmatpush2.msra.mxu0 0.0
  %1484 = vmatprep.subr.mxu0 0.0
  %1485 = vmatpush2.msra.mxu0 0.0
  %1486 = vmatprep.subr.mxu0 0.0
  %1487 = vmatpush2.msra.mxu0 0.0
  %1488 = vmatprep.subr.mxu0 0.0
  %1489 = vmatpush2.msra.mxu0 0.0
  %1490 = vmatprep.subr.mxu0 0.0
  %1491 = vmatpush2.msra.mxu0 0.0
  %1492 = vmatprep.subr.mxu0 0.0
  %1493 = vmatpush2.msra.mxu0 0.0
  %1494 = vmatprep.subr.mxu0 0.0
  %1495 = vmatpush2.msra.mxu0 0.0
  %1496 = vmatprep.subr.mxu0 0.0
  %1497 = vmatpush2.msra.mxu0 0.0
  %1498 = vmatprep.subr.mxu0 0.0
  %1499 = vmatpush2.msra.mxu0 0.0
  %1500 = vmatprep.subr.mxu0 0.0
  %1501 = vmatpush2.msra.mxu0 0.0
  %1502 = vmatprep.subr.mxu0 0.0
  %1503 = vmatpush2.msra.mxu0 0.0
  %1504 = vmatprep.subr.mxu0 0.0
  %1505 = vmatpush2.msra.mxu0 0.0
  %1506 = vmatprep.subr.mxu0 0.0
  %1507 = vmatpush2.msra.mxu0 0.0
  %1508 = vmatprep.subr.mxu0 0.0
  %1509 = vmatpush2.msra.mxu0 0.0
  %1510 = vmatprep.subr.mxu0 0.0
  %1511 = vmatpush2.msra.mxu0 0.0
  %1512 = vmatprep.subr.mxu0 0.0
  %1513 = vmatpush2.msra.mxu0 0.0
  %1514 = vmatprep.mubr.f32.mxu0 0.0
  %1515 = vmatmul.mubr.f32.gmra.mxu0 %v1235
  %v1516 = vpop.f32.mrf.mxu0
  %v1517 = vadd.f32 %v1221, %v1516
  %v1518 = vpop.f32.mrf.mxu0
  %v1519 = vadd.f32 %v1225, %v1518
  %1520 = vdwg.mxu0
  %vm1521 = vcmp.gt.f32.partialorder %v1304, 0.0
  %vm1522 = vcmp.gt.f32.partialorder %v1306, 0.0
  %vm1523 = vcmp.gt.f32.partialorder %v1375, 0.0
  %vm1524 = vcmp.gt.f32.partialorder %v1377, 0.0
  %vm1525 = vcmp.gt.f32.partialorder %v1446, 0.0
  %vm1526 = vcmp.gt.f32.partialorder %v1448, 0.0
  %vm1527 = vcmp.gt.f32.partialorder %v1517, 0.0
  %vm1528 = vcmp.gt.f32.partialorder %v1519, 0.0
  %v1529 = vmul.f32 %v1304, 1.442695
  %v1530 = vpow.pop %v1529
  %v1531 = vmul.f32 %v1306, 1.442695
  %v1532 = vpow.pop %v1531
  %v1533 = vmul.f32 %v1375, 1.442695
  %v1534 = vpow.pop %v1533
  %v1535 = vmul.f32 %v1377, 1.442695
  %v1536 = vpow.pop %v1535
  %v1537 = vmul.f32 %v1446, 1.442695
  %v1538 = vpow.pop %v1537
  %v1539 = vmul.f32 %v1448, 1.442695
  %v1540 = vpow.pop %v1539
  %v1541 = vmul.f32 %v1517, 1.442695
  %v1542 = vpow.pop %v1541
  %v1543 = vmul.f32 %v1519, 1.442695
  %v1544 = vpow.pop %v1543
  %v1545 = vsub.f32 %v1530, 1.0
  %v1546 = vsub.f32 %v1532, 1.0
  %v1547 = vsub.f32 %v1534, 1.0
  %v1548 = vsub.f32 %v1536, 1.0
  %v1549 = vsub.f32 %v1538, 1.0
  %v1550 = vsub.f32 %v1540, 1.0
  %v1551 = vsub.f32 %v1542, 1.0
  %v1552 = vsub.f32 %v1544, 1.0
  %v1553 = vsel %vm1521, %v1304, %v1545
  %v1554 = vsel %vm1522, %v1306, %v1546
  %v1555 = vsel %vm1523, %v1375, %v1547
  %v1556 = vsel %vm1524, %v1377, %v1548
  %v1557 = vsel %vm1525, %v1446, %v1549
  %v1558 = vsel %vm1526, %v1448, %v1550
  %v1559 = vsel %vm1527, %v1517, %v1551
  %v1560 = vsel %vm1528, %v1519, %v1552
  %v1561 = vld [vmem:[%s21] sm:$0xff]
  %v1562 = vld [vmem:[%s21 + $0x8] sm:$0xff]
  %v1563 = vld [vmem:[%s21 + $0x10] sm:$0xff]
  %v1564 = vld [vmem:[%s21 + $0x18] sm:$0xff]
  %v1565 = vld [vmem:[%s21 + $0x20] sm:$0xff]
  %v1566 = vld [vmem:[%s21 + $0x28] sm:$0xff]
  %v1567 = vld [vmem:[%s21 + $0x30] sm:$0xff]
  %v1568 = vld [vmem:[%s21 + $0x38] sm:$0xff]
  %v1569 = vld [vmem:[%s21 + $0x40] sm:$0xff]
  %v1570 = vld [vmem:[%s21 + $0x48] sm:$0xff]
  %v1571 = vld [vmem:[%s21 + $0x50] sm:$0xff]
  %v1572 = vld [vmem:[%s21 + $0x58] sm:$0xff]
  %v1573 = vld [vmem:[%s21 + $0x60] sm:$0xff]
  %v1574 = vld [vmem:[%s21 + $0x68] sm:$0xff]
  %v1575 = vld [vmem:[%s21 + $0x70] sm:$0xff]
  %v1576 = vld [vmem:[%s21 + $0x78] sm:$0xff]
  %v1577 = vld [vmem:[%s21 + $0x80] sm:$0xff]
  %v1578 = vld [vmem:[%s21 + $0x88] sm:$0xff]
  %v1579 = vld [vmem:[%s21 + $0x90] sm:$0xff]
  %v1580 = vld [vmem:[%s21 + $0x98] sm:$0xff]
  %v1581 = vld [vmem:[%s21 + $0xa0] sm:$0xff]
  %v1582 = vld [vmem:[%s21 + $0xa8] sm:$0xff]
  %v1583 = vld [vmem:[%s21 + $0xb0] sm:$0xff]
  %v1584 = vld [vmem:[%s21 + $0xb8] sm:$0xff]
  %v1585 = vld [vmem:[%s21 + $0xc0] sm:$0xff]
  %v1586 = vld [vmem:[%s21 + $0xc8] sm:$0xff]
  %v1587 = vld [vmem:[%s21 + $0xd0] sm:$0xff]
  %v1588 = vld [vmem:[%s21 + $0xd8] sm:$0xff]
  %v1589 = vld [vmem:[%s21 + $0xe0] sm:$0xff]
  %v1590 = vld [vmem:[%s21 + $0xe8] sm:$0xff]
  %v1591 = vld [vmem:[%s21 + $0xf0] sm:$0xff]
  %v1592 = vld [vmem:[%s21 + $0xf8] sm:$0xff]
  %v1593 = vld [vmem:[%s21 + $0x100] sm:$0xff]
  %v1594 = vld [vmem:[%s21 + $0x108] sm:$0xff]
  %v1595 = vld [vmem:[%s21 + $0x110] sm:$0xff]
  %v1596 = vld [vmem:[%s21 + $0x118] sm:$0xff]
  %v1597 = vld [vmem:[%s21 + $0x120] sm:$0xff]
  %v1598 = vld [vmem:[%s21 + $0x128] sm:$0xff]
  %v1599 = vld [vmem:[%s21 + $0x130] sm:$0xff]
  %v1600 = vld [vmem:[%s21 + $0x138] sm:$0xff]
  %v1601 = vld [vmem:[%s21 + $0x140] sm:$0xff]
  %v1602 = vld [vmem:[%s21 + $0x148] sm:$0xff]
  %v1603 = vld [vmem:[%s21 + $0x150] sm:$0xff]
  %v1604 = vld [vmem:[%s21 + $0x158] sm:$0xff]
  %v1605 = vld [vmem:[%s21 + $0x160] sm:$0xff]
  %v1606 = vld [vmem:[%s21 + $0x168] sm:$0xff]
  %v1607 = vld [vmem:[%s21 + $0x170] sm:$0xff]
  %v1608 = vld [vmem:[%s21 + $0x178] sm:$0xff]
  %v1609 = vld [vmem:[%s21 + $0x180] sm:$0xff]
  %v1610 = vld [vmem:[%s21 + $0x188] sm:$0xff]
  %v1611 = vld [vmem:[%s21 + $0x190] sm:$0xff]
  %v1612 = vld [vmem:[%s21 + $0x198] sm:$0xff]
  %v1613 = vld [vmem:[%s21 + $0x1a0] sm:$0xff]
  %v1614 = vld [vmem:[%s21 + $0x1a8] sm:$0xff]
  %v1615 = vld [vmem:[%s21 + $0x1b0] sm:$0xff]
  %v1616 = vld [vmem:[%s21 + $0x1b8] sm:$0xff]
  %v1617 = vld [vmem:[%s21 + $0x1c0] sm:$0xff]
  %v1618 = vld [vmem:[%s21 + $0x1c8] sm:$0xff]
  %v1619 = vld [vmem:[%s21 + $0x1d0] sm:$0xff]
  %v1620 = vld [vmem:[%s21 + $0x1d8] sm:$0xff]
  %v1621 = vld [vmem:[%s21 + $0x1e0] sm:$0xff]
  %v1622 = vld [vmem:[%s21 + $0x1e8] sm:$0xff]
  %v1623 = vld [vmem:[%s21 + $0x1f0] sm:$0xff]
  %v1624 = vld [vmem:[%s21 + $0x1f8] sm:$0xff]
  %v1625 = vld [vmem:[%s21 + $0x200] sm:$0xff]
  %v1626 = vld [vmem:[%s21 + $0x208] sm:$0xff]
  %v1627 = vld [vmem:[%s21 + $0x210] sm:$0xff]
  %v1628 = vld [vmem:[%s21 + $0x218] sm:$0xff]
  %v1629 = vld [vmem:[%s21 + $0x220] sm:$0xff]
  %v1630 = vld [vmem:[%s21 + $0x228] sm:$0xff]
  %v1631 = vld [vmem:[%s21 + $0x230] sm:$0xff]
  %v1632 = vld [vmem:[%s21 + $0x238] sm:$0xff]
  %v1633 = vld [vmem:[%s21 + $0x240] sm:$0xff]
  %v1634 = vld [vmem:[%s21 + $0x248] sm:$0xff]
  %v1635 = vld [vmem:[%s21 + $0x250] sm:$0xff]
  %v1636 = vld [vmem:[%s21 + $0x258] sm:$0xff]
  %v1637 = vld [vmem:[%s21 + $0x260] sm:$0xff]
  %v1638 = vld [vmem:[%s21 + $0x268] sm:$0xff]
  %v1639 = vld [vmem:[%s21 + $0x270] sm:$0xff]
  %v1640 = vld [vmem:[%s21 + $0x278] sm:$0xff]
  %v1641 = vld [vmem:[%s21 + $0x280] sm:$0xff]
  %v1642 = vld [vmem:[%s21 + $0x288] sm:$0xff]
  %v1643 = vld [vmem:[%s21 + $0x290] sm:$0xff]
  %v1644 = vld [vmem:[%s21 + $0x298] sm:$0xff]
  %v1645 = vld [vmem:[%s21 + $0x2a0] sm:$0xff]
  %v1646 = vld [vmem:[%s21 + $0x2a8] sm:$0xff]
  %v1647 = vld [vmem:[%s21 + $0x2b0] sm:$0xff]
  %v1648 = vld [vmem:[%s21 + $0x2b8] sm:$0xff]
  %v1649 = vld [vmem:[%s21 + $0x2c0] sm:$0xff]
  %v1650 = vld [vmem:[%s21 + $0x2c8] sm:$0xff]
  %v1651 = vld [vmem:[%s21 + $0x2d0] sm:$0xff]
  %v1652 = vld [vmem:[%s21 + $0x2d8] sm:$0xff]
  %v1653 = vld [vmem:[%s21 + $0x2e0] sm:$0xff]
  %v1654 = vld [vmem:[%s21 + $0x2e8] sm:$0xff]
  %v1655 = vld [vmem:[%s21 + $0x2f0] sm:$0xff]
  %v1656 = vld [vmem:[%s21 + $0x2f8] sm:$0xff]
  %v1657 = vld [vmem:[%s21 + $0x300] sm:$0xff]
  %v1658 = vld [vmem:[%s21 + $0x308] sm:$0xff]
  %v1659 = vld [vmem:[%s21 + $0x310] sm:$0xff]
  %v1660 = vld [vmem:[%s21 + $0x318] sm:$0xff]
  %v1661 = vld [vmem:[%s21 + $0x320] sm:$0xff]
  %v1662 = vld [vmem:[%s21 + $0x328] sm:$0xff]
  %v1663 = vld [vmem:[%s21 + $0x330] sm:$0xff]
  %v1664 = vld [vmem:[%s21 + $0x338] sm:$0xff]
  %v1665 = vld [vmem:[%s21 + $0x340] sm:$0xff]
  %v1666 = vld [vmem:[%s21 + $0x348] sm:$0xff]
  %v1667 = vld [vmem:[%s21 + $0x350] sm:$0xff]
  %v1668 = vld [vmem:[%s21 + $0x358] sm:$0xff]
  %v1669 = vld [vmem:[%s21 + $0x360] sm:$0xff]
  %v1670 = vld [vmem:[%s21 + $0x368] sm:$0xff]
  %v1671 = vld [vmem:[%s21 + $0x370] sm:$0xff]
  %v1672 = vld [vmem:[%s21 + $0x378] sm:$0xff]
  %v1673 = vld [vmem:[%s21 + $0x380] sm:$0xff]
  %v1674 = vld [vmem:[%s21 + $0x388] sm:$0xff]
  %v1675 = vld [vmem:[%s21 + $0x390] sm:$0xff]
  %v1676 = vld [vmem:[%s21 + $0x398] sm:$0xff]
  %v1677 = vld [vmem:[%s21 + $0x3a0] sm:$0xff]
  %v1678 = vld [vmem:[%s21 + $0x3a8] sm:$0xff]
  %v1679 = vld [vmem:[%s21 + $0x3b0] sm:$0xff]
  %v1680 = vld [vmem:[%s21 + $0x3b8] sm:$0xff]
  %v1681 = vld [vmem:[%s21 + $0x3c0] sm:$0xff]
  %v1682 = vld [vmem:[%s21 + $0x3c8] sm:$0xff]
  %v1683 = vld [vmem:[%s21 + $0x3d0] sm:$0xff]
  %v1684 = vld [vmem:[%s21 + $0x3d8] sm:$0xff]
  %v1685 = vld [vmem:[%s21 + $0x3e0] sm:$0xff]
  %v1686 = vld [vmem:[%s21 + $0x3e8] sm:$0xff]
  %v1687 = vld [vmem:[%s21 + $0x3f0] sm:$0xff]
  %v1688 = vld [vmem:[%s21 + $0x3f8] sm:$0xff]
  %v1689 = vld [vmem:[#allocation3] sm:$0x1]
  %v1691 = vlaneseq
  %v1692 = vshrl.u32 %v1691, 7
  %v1693 = vsub.s32 0, %v1692
  %v1694 = vrot.slane %v1689, %v1693
  %1696 = vmatprep.subr.mxu0 0.0
  %1697 = vmatpush1.msra.mxu0 %v1576
  %1698 = vmatprep.subr.mxu0 0.0
  %1699 = vmatpush1.msra.mxu0 %v1575
  %1700 = vmatprep.subr.mxu0 0.0
  %1701 = vmatpush1.msra.mxu0 %v1574
  %1702 = vmatprep.subr.mxu0 0.0
  %1703 = vmatpush1.msra.mxu0 %v1573
  %1704 = vmatprep.subr.mxu0 0.0
  %1705 = vmatpush1.msra.mxu0 %v1572
  %1706 = vmatprep.subr.mxu0 0.0
  %1707 = vmatpush1.msra.mxu0 %v1571
  %1708 = vmatprep.subr.mxu0 0.0
  %1709 = vmatpush1.msra.mxu0 %v1570
  %1710 = vmatprep.subr.mxu0 0.0
  %1711 = vmatpush1.msra.mxu0 %v1569
  %1712 = vmatprep.subr.mxu0 0.0
  %1713 = vmatpush1.msra.mxu0 %v1568
  %1714 = vmatprep.subr.mxu0 0.0
  %1715 = vmatpush1.msra.mxu0 %v1567
  %1716 = vmatprep.subr.mxu0 0.0
  %1717 = vmatpush1.msra.mxu0 %v1566
  %1718 = vmatprep.subr.mxu0 0.0
  %1719 = vmatpush1.msra.mxu0 %v1565
  %1720 = vmatprep.subr.mxu0 0.0
  %1721 = vmatpush1.msra.mxu0 %v1564
  %1722 = vmatprep.subr.mxu0 0.0
  %1723 = vmatpush1.msra.mxu0 %v1563
  %1724 = vmatprep.subr.mxu0 0.0
  %1725 = vmatpush1.msra.mxu0 %v1562
  %1726 = vmatprep.subr.mxu0 0.0
  %1727 = vmatpush1.msra.mxu0 %v1561
  %1728 = vmatprep.subr.mxu0 0.0
  %1729 = vmatpush2.msra.mxu0 %v1592
  %1730 = vmatprep.subr.mxu0 0.0
  %1731 = vmatpush2.msra.mxu0 %v1591
  %1732 = vmatprep.subr.mxu0 0.0
  %1733 = vmatpush2.msra.mxu0 %v1590
  %1734 = vmatprep.subr.mxu0 0.0
  %1735 = vmatpush2.msra.mxu0 %v1589
  %1736 = vmatprep.subr.mxu0 0.0
  %1737 = vmatpush2.msra.mxu0 %v1588
  %1738 = vmatprep.subr.mxu0 0.0
  %1739 = vmatpush2.msra.mxu0 %v1587
  %1740 = vmatprep.subr.mxu0 0.0
  %1741 = vmatpush2.msra.mxu0 %v1586
  %1742 = vmatprep.subr.mxu0 0.0
  %1743 = vmatpush2.msra.mxu0 %v1585
  %1744 = vmatprep.subr.mxu0 0.0
  %1745 = vmatpush2.msra.mxu0 %v1584
  %1746 = vmatprep.subr.mxu0 0.0
  %1747 = vmatpush2.msra.mxu0 %v1583
  %1748 = vmatprep.subr.mxu0 0.0
  %1749 = vmatpush2.msra.mxu0 %v1582
  %1750 = vmatprep.subr.mxu0 0.0
  %1751 = vmatpush2.msra.mxu0 %v1581
  %1752 = vmatprep.subr.mxu0 0.0
  %1753 = vmatpush2.msra.mxu0 %v1580
  %1754 = vmatprep.subr.mxu0 0.0
  %1755 = vmatpush2.msra.mxu0 %v1579
  %1756 = vmatprep.subr.mxu0 0.0
  %1757 = vmatpush2.msra.mxu0 %v1578
  %1758 = vmatprep.subr.mxu0 0.0
  %1759 = vmatpush2.msra.mxu0 %v1577
  %1760 = vmatprep.mubr.f32.mxu0 %v1554
  %1761 = vmatmul.mubr.f32.gmra.mxu0 %v1553
  %v1762 = vpop.f32.mrf.mxu0
  %v1763 = vadd.f32 %v1694, %v1762
  %v1764 = vpop.f32.mrf.mxu0
  %1765 = vdwg.mxu0
  %1766 = vmatprep.subr.mxu0 0.0
  %1767 = vmatpush1.msra.mxu0 %v1608
  %1768 = vmatprep.subr.mxu0 0.0
  %1769 = vmatpush1.msra.mxu0 %v1607
  %1770 = vmatprep.subr.mxu0 0.0
  %1771 = vmatpush1.msra.mxu0 %v1606
  %1772 = vmatprep.subr.mxu0 0.0
  %1773 = vmatpush1.msra.mxu0 %v1605
  %1774 = vmatprep.subr.mxu0 0.0
  %1775 = vmatpush1.msra.mxu0 %v1604
  %1776 = vmatprep.subr.mxu0 0.0
  %1777 = vmatpush1.msra.mxu0 %v1603
  %1778 = vmatprep.subr.mxu0 0.0
  %1779 = vmatpush1.msra.mxu0 %v1602
  %1780 = vmatprep.subr.mxu0 0.0
  %1781 = vmatpush1.msra.mxu0 %v1601
  %1782 = vmatprep.subr.mxu0 0.0
  %1783 = vmatpush1.msra.mxu0 %v1600
  %1784 = vmatprep.subr.mxu0 0.0
  %1785 = vmatpush1.msra.mxu0 %v1599
  %1786 = vmatprep.subr.mxu0 0.0
  %1787 = vmatpush1.msra.mxu0 %v1598
  %1788 = vmatprep.subr.mxu0 0.0
  %1789 = vmatpush1.msra.mxu0 %v1597
  %1790 = vmatprep.subr.mxu0 0.0
  %1791 = vmatpush1.msra.mxu0 %v1596
  %1792 = vmatprep.subr.mxu0 0.0
  %1793 = vmatpush1.msra.mxu0 %v1595
  %1794 = vmatprep.subr.mxu0 0.0
  %1795 = vmatpush1.msra.mxu0 %v1594
  %1796 = vmatprep.subr.mxu0 0.0
  %1797 = vmatpush1.msra.mxu0 %v1593
  %1798 = vmatprep.subr.mxu0 0.0
  %1799 = vmatpush2.msra.mxu0 %v1624
  %1800 = vmatprep.subr.mxu0 0.0
  %1801 = vmatpush2.msra.mxu0 %v1623
  %1802 = vmatprep.subr.mxu0 0.0
  %1803 = vmatpush2.msra.mxu0 %v1622
  %1804 = vmatprep.subr.mxu0 0.0
  %1805 = vmatpush2.msra.mxu0 %v1621
  %1806 = vmatprep.subr.mxu0 0.0
  %1807 = vmatpush2.msra.mxu0 %v1620
  %1808 = vmatprep.subr.mxu0 0.0
  %1809 = vmatpush2.msra.mxu0 %v1619
  %1810 = vmatprep.subr.mxu0 0.0
  %1811 = vmatpush2.msra.mxu0 %v1618
  %1812 = vmatprep.subr.mxu0 0.0
  %1813 = vmatpush2.msra.mxu0 %v1617
  %1814 = vmatprep.subr.mxu0 0.0
  %1815 = vmatpush2.msra.mxu0 %v1616
  %1816 = vmatprep.subr.mxu0 0.0
  %1817 = vmatpush2.msra.mxu0 %v1615
  %1818 = vmatprep.subr.mxu0 0.0
  %1819 = vmatpush2.msra.mxu0 %v1614
  %1820 = vmatprep.subr.mxu0 0.0
  %1821 = vmatpush2.msra.mxu0 %v1613
  %1822 = vmatprep.subr.mxu0 0.0
  %1823 = vmatpush2.msra.mxu0 %v1612
  %1824 = vmatprep.subr.mxu0 0.0
  %1825 = vmatpush2.msra.mxu0 %v1611
  %1826 = vmatprep.subr.mxu0 0.0
  %1827 = vmatpush2.msra.mxu0 %v1610
  %1828 = vmatprep.subr.mxu0 0.0
  %1829 = vmatpush2.msra.mxu0 %v1609
  %1830 = vmatprep.mubr.f32.mxu0 %v1556
  %1831 = vmatmul.mubr.f32.gmra.mxu0 %v1555
  %v1832 = vpop.f32.mrf.mxu0
  %v1833 = vadd.f32 %v1763, %v1832
  %v1834 = vpop.f32.mrf.mxu0
  %1835 = vdwg.mxu0
  %1836 = vmatprep.subr.mxu0 0.0
  %1837 = vmatpush1.msra.mxu0 %v1640
  %1838 = vmatprep.subr.mxu0 0.0
  %1839 = vmatpush1.msra.mxu0 %v1639
  %1840 = vmatprep.subr.mxu0 0.0
  %1841 = vmatpush1.msra.mxu0 %v1638
  %1842 = vmatprep.subr.mxu0 0.0
  %1843 = vmatpush1.msra.mxu0 %v1637
  %1844 = vmatprep.subr.mxu0 0.0
  %1845 = vmatpush1.msra.mxu0 %v1636
  %1846 = vmatprep.subr.mxu0 0.0
  %1847 = vmatpush1.msra.mxu0 %v1635
  %1848 = vmatprep.subr.mxu0 0.0
  %1849 = vmatpush1.msra.mxu0 %v1634
  %1850 = vmatprep.subr.mxu0 0.0
  %1851 = vmatpush1.msra.mxu0 %v1633
  %1852 = vmatprep.subr.mxu0 0.0
  %1853 = vmatpush1.msra.mxu0 %v1632
  %1854 = vmatprep.subr.mxu0 0.0
  %1855 = vmatpush1.msra.mxu0 %v1631
  %1856 = vmatprep.subr.mxu0 0.0
  %1857 = vmatpush1.msra.mxu0 %v1630
  %1858 = vmatprep.subr.mxu0 0.0
  %1859 = vmatpush1.msra.mxu0 %v1629
  %1860 = vmatprep.subr.mxu0 0.0
  %1861 = vmatpush1.msra.mxu0 %v1628
  %1862 = vmatprep.subr.mxu0 0.0
  %1863 = vmatpush1.msra.mxu0 %v1627
  %1864 = vmatprep.subr.mxu0 0.0
  %1865 = vmatpush1.msra.mxu0 %v1626
  %1866 = vmatprep.subr.mxu0 0.0
  %1867 = vmatpush1.msra.mxu0 %v1625
  %1868 = vmatprep.subr.mxu0 0.0
  %1869 = vmatpush2.msra.mxu0 %v1656
  %1870 = vmatprep.subr.mxu0 0.0
  %1871 = vmatpush2.msra.mxu0 %v1655
  %1872 = vmatprep.subr.mxu0 0.0
  %1873 = vmatpush2.msra.mxu0 %v1654
  %1874 = vmatprep.subr.mxu0 0.0
  %1875 = vmatpush2.msra.mxu0 %v1653
  %1876 = vmatprep.subr.mxu0 0.0
  %1877 = vmatpush2.msra.mxu0 %v1652
  %1878 = vmatprep.subr.mxu0 0.0
  %1879 = vmatpush2.msra.mxu0 %v1651
  %1880 = vmatprep.subr.mxu0 0.0
  %1881 = vmatpush2.msra.mxu0 %v1650
  %1882 = vmatprep.subr.mxu0 0.0
  %1883 = vmatpush2.msra.mxu0 %v1649
  %1884 = vmatprep.subr.mxu0 0.0
  %1885 = vmatpush2.msra.mxu0 %v1648
  %1886 = vmatprep.subr.mxu0 0.0
  %1887 = vmatpush2.msra.mxu0 %v1647
  %1888 = vmatprep.subr.mxu0 0.0
  %1889 = vmatpush2.msra.mxu0 %v1646
  %1890 = vmatprep.subr.mxu0 0.0
  %1891 = vmatpush2.msra.mxu0 %v1645
  %1892 = vmatprep.subr.mxu0 0.0
  %1893 = vmatpush2.msra.mxu0 %v1644
  %1894 = vmatprep.subr.mxu0 0.0
  %1895 = vmatpush2.msra.mxu0 %v1643
  %1896 = vmatprep.subr.mxu0 0.0
  %1897 = vmatpush2.msra.mxu0 %v1642
  %1898 = vmatprep.subr.mxu0 0.0
  %1899 = vmatpush2.msra.mxu0 %v1641
  %1900 = vmatprep.mubr.f32.mxu0 %v1558
  %1901 = vmatmul.mubr.f32.gmra.mxu0 %v1557
  %v1902 = vpop.f32.mrf.mxu0
  %v1903 = vadd.f32 %v1833, %v1902
  %v1904 = vpop.f32.mrf.mxu0
  %1905 = vdwg.mxu0
  %1906 = vmatprep.subr.mxu0 0.0
  %1907 = vmatpush1.msra.mxu0 %v1672
  %1908 = vmatprep.subr.mxu0 0.0
  %1909 = vmatpush1.msra.mxu0 %v1671
  %1910 = vmatprep.subr.mxu0 0.0
  %1911 = vmatpush1.msra.mxu0 %v1670
  %1912 = vmatprep.subr.mxu0 0.0
  %1913 = vmatpush1.msra.mxu0 %v1669
  %1914 = vmatprep.subr.mxu0 0.0
  %1915 = vmatpush1.msra.mxu0 %v1668
  %1916 = vmatprep.subr.mxu0 0.0
  %1917 = vmatpush1.msra.mxu0 %v1667
  %1918 = vmatprep.subr.mxu0 0.0
  %1919 = vmatpush1.msra.mxu0 %v1666
  %1920 = vmatprep.subr.mxu0 0.0
  %1921 = vmatpush1.msra.mxu0 %v1665
  %1922 = vmatprep.subr.mxu0 0.0
  %1923 = vmatpush1.msra.mxu0 %v1664
  %1924 = vmatprep.subr.mxu0 0.0
  %1925 = vmatpush1.msra.mxu0 %v1663
  %1926 = vmatprep.subr.mxu0 0.0
  %1927 = vmatpush1.msra.mxu0 %v1662
  %1928 = vmatprep.subr.mxu0 0.0
  %1929 = vmatpush1.msra.mxu0 %v1661
  %1930 = vmatprep.subr.mxu0 0.0
  %1931 = vmatpush1.msra.mxu0 %v1660
  %1932 = vmatprep.subr.mxu0 0.0
  %1933 = vmatpush1.msra.mxu0 %v1659
  %1934 = vmatprep.subr.mxu0 0.0
  %1935 = vmatpush1.msra.mxu0 %v1658
  %1936 = vmatprep.subr.mxu0 0.0
  %1937 = vmatpush1.msra.mxu0 %v1657
  %1938 = vmatprep.subr.mxu0 0.0
  %1939 = vmatpush2.msra.mxu0 %v1688
  %1940 = vmatprep.subr.mxu0 0.0
  %1941 = vmatpush2.msra.mxu0 %v1687
  %1942 = vmatprep.subr.mxu0 0.0
  %1943 = vmatpush2.msra.mxu0 %v1686
  %1944 = vmatprep.subr.mxu0 0.0
  %1945 = vmatpush2.msra.mxu0 %v1685
  %1946 = vmatprep.subr.mxu0 0.0
  %1947 = vmatpush2.msra.mxu0 %v1684
  %1948 = vmatprep.subr.mxu0 0.0
  %1949 = vmatpush2.msra.mxu0 %v1683
  %1950 = vmatprep.subr.mxu0 0.0
  %1951 = vmatpush2.msra.mxu0 %v1682
  %1952 = vmatprep.subr.mxu0 0.0
  %1953 = vmatpush2.msra.mxu0 %v1681
  %1954 = vmatprep.subr.mxu0 0.0
  %1955 = vmatpush2.msra.mxu0 %v1680
  %1956 = vmatprep.subr.mxu0 0.0
  %1957 = vmatpush2.msra.mxu0 %v1679
  %1958 = vmatprep.subr.mxu0 0.0
  %1959 = vmatpush2.msra.mxu0 %v1678
  %1960 = vmatprep.subr.mxu0 0.0
  %1961 = vmatpush2.msra.mxu0 %v1677
  %1962 = vmatprep.subr.mxu0 0.0
  %1963 = vmatpush2.msra.mxu0 %v1676
  %1964 = vmatprep.subr.mxu0 0.0
  %1965 = vmatpush2.msra.mxu0 %v1675
  %1966 = vmatprep.subr.mxu0 0.0
  %1967 = vmatpush2.msra.mxu0 %v1674
  %1968 = vmatprep.subr.mxu0 0.0
  %1969 = vmatpush2.msra.mxu0 %v1673
  %1970 = vmatprep.mubr.f32.mxu0 %v1560
  %1971 = vmatmul.mubr.f32.gmra.mxu0 %v1559
  %v1972 = vpop.f32.mrf.mxu0
  %v1973 = vadd.f32 %v1903, %v1972
  %v1974 = vpop.f32.mrf.mxu0
  %1975 = vdwg.mxu0
  %v1976 = vsub.f32 0.0, %v1973
  %v1977 = vmul.f32 %v1976, 1.442695
  %v1978 = vpow.pop %v1977
  %v1979 = vadd.f32 %v1978, 1.0
  %v1980 = vrcp.pop %v1979
  %v1981 = vmul.f32 1.0, %v1980
  %vm1982 = vcmask 1024
  %1983 = vst.msk [vmem:[%s23] sm:$0x3] %vm1982, %v1981
  // Predicated region
  $region94: #{sconv1d_2_forward.1} parent=0 // pred_check
    _
  $region95: #{sconv1d_2_forward.1} parent=0 // pred_check_branch
    %1985 = sbr.rel (0) target = $region97
  $region96: #{sconv1d_2_forward.1} parent=0 // pred_region
    _
  $region97: #{sconv1d_2_forward.1} parent=0 // pred_fallthru
    _
  // Predicated region
  $region98: #{sconv1d_2_forward.1} parent=0 // pred_check
    _
  $region99: #{sconv1d_2_forward.1} parent=0 // pred_check_branch
    %1987 = sbr.rel (0) target = $region101
  $region100: #{sconv1d_2_forward.1} parent=0 // pred_region
    _
  $region101: #{sconv1d_2_forward.1} parent=0 // pred_fallthru
    _

</llo_original>
